<compile_context>
chip_gen: v7x
topology: tpu7x:2x2x1
jax: 0.10.0
libtpu: 0.0.40
codegen_flags: <defaults>
</compile_context>

<pallas_src>
import functools
import math

import jax
import jax.numpy as jnp
from jax import lax
from jax.experimental import pallas as pl
from jax.experimental.pallas import tpu as pltpu

_INV_SQRT2 = 0.7071067811865475244


def _round_up(x, m):
    return (x + m - 1) // m * m


def _default_tile_m():
    # v6e's wider MXU/vector datapath + fewer grid steps favour TM=256; v5e and
    # v7x (64 MiB VMEM per core) stay at TM=128.
    try:
        kind = jax.devices()[0].device_kind.lower()
    except Exception:
        return 128
    return 256 if "v6" in kind else 128


def _apm_p_graph_kernel(q_ref, c_ref, prm_ref, out_ref, *, nsample_k):
    qt = q_ref[...]                       # [8, TM]   rows 0..2 = query x,y,z
    cm = c_ref[...]                       # [n_c, 8]  cols 0..2 = candidate x,y,z (resident)
    w = (prm_ref[0], prm_ref[1], prm_ref[2])
    bias = prm_ref[3]

    qs = [qt[c:c + 1, :] for c in range(3)]      # [1, TM]
    ps = [cm[:, c:c + 1] for c in range(3)]      # [n_c, 1]

    # Exact squared distances on the VPU (bitwise identical to the reference's
    # sum((p - q)^2)); channel 0 initializes d / h0 directly (no zeros pass).
    diff = ps[0] - qs[0]
    d = diff * diff                               # [n_c, TM]
    h0 = w[0] * qs[0]                             # [1, TM]  h[0] = <q, w>
    for c in (1, 2):
        diff = ps[c] - qs[c]
        d = d + diff * diff
        h0 = h0 + w[c] * qs[c]

    # Read-only rising-threshold scan: carry only the [1,TM] threshold m; never
    # rewrite d.  After nsample_k iterations m is the nsample_k-th smallest
    # distinct distance per query column.  The self row (d == 0 exactly) is just
    # one of the selected values and contributes 0 to the neighbor sum below.
    inf = jnp.float32(jnp.inf)

    def next_threshold(_, m):
        return jnp.min(jnp.where(d > m, d, inf), axis=0, keepdims=True)

    m_k = lax.fori_loop(0, nsample_k, next_threshold,
                        jnp.full_like(h0, -inf), unroll=True)

    # Fused selection + neighbor message sum; w.|q - p| is recomputed on the fly
    # (no materialized [n_c, TM] S array):
    #   hj[i] = sum_{j : d[j,i] <= m_k[i]}  w . |q_i - p_j|
    sel = d <= m_k
    hj = w[0] * jnp.sum(jnp.where(sel, jnp.abs(ps[0] - qs[0]), 0.0),
                        axis=0, keepdims=True)
    for c in (1, 2):
        hj = hj + w[c] * jnp.sum(jnp.where(sel, jnp.abs(ps[c] - qs[c]), 0.0),
                                 axis=0, keepdims=True)

    # GCNConv on the per-point star graph + AdaptiveAvgPool1d over its nsample_k
    # node embeddings:
    #   node0 = h0 + b ; node_j = h0/sqrt(2) + hj/2 + b ; out = mean over k nodes.
    k = jnp.float32(nsample_k)
    n_nbr = jnp.float32(nsample_k - 1)
    out = ((1.0 + n_nbr * _INV_SQRT2) * h0 + 0.5 * hj + k * bias) / k     # [1, TM]

    # Lane-dense, (8,128)-aligned output tile; row 0 carries the payload.
    out_ref[...] = jnp.broadcast_to(out, out_ref.shape)


def apm_p_graph_forward(p, weight, bias, nsample_k=12, tile_m=None):
    """p: [B, N, 3] float32. Returns avg_embedding [B*N, 1] (the module's forward output)."""
    B, N, C = p.shape
    assert C == 3, "points must be 3-D"
    n = B * N
    if n < nsample_k:
        # TODO(synk): no graceful fallback for < nsample_k points (pointops degenerates too).
        raise ValueError(f"need at least nsample_k={nsample_k} points, got {n}")
    if tile_m is None:
        tile_m = _default_tile_m()

    pf = p.reshape(n, 3).astype(jnp.float32)
    w = jnp.asarray(weight, jnp.float32).reshape(3)
    b = jnp.asarray(bias, jnp.float32).reshape(1)

    n_q = _round_up(n, tile_m)            # padded query count (lane axis)
    n_c = _round_up(n, 8)                 # padded candidate count (sublane axis)
    num_tiles = n_q // tile_m

    # Query operand [8, n_q]: rows 0..2 = x,y,z; padded columns are zeros (discarded).
    q_mat = jnp.concatenate(
        [jnp.pad(pf.T, ((0, 0), (0, n_q - n))),
         jnp.zeros((5, n_q), jnp.float32)], axis=0)

    # Candidate operand [n_c, 8]: cols 0..2 = x,y,z; padded rows are pushed far away
    # (d ~ 3e12) so they are never among the nsample_k nearest of any real query.
    c_mat = jnp.concatenate(
        [jnp.concatenate([pf, jnp.full((n_c - n, 3), 1e6, jnp.float32)], axis=0),
         jnp.zeros((n_c, 5), jnp.float32)], axis=1)

    params = jnp.concatenate([w, b])      # SMEM scalars: [w0, w1, w2, bias]

    kernel = functools.partial(_apm_p_graph_kernel, nsample_k=nsample_k)

    # ~(9 + 3*k + 15) VPU ops per candidate x query pair; HBM traffic is just the
    # operands plus the small output slab.  Per-step VMEM ~= d [n_c,TM] + transients
    # (+ the resident [n_c,8] block): ~1-1.5 KiB * n_c at TM=128.
    cost = pl.CostEstimate(
        flops=int((24 + 3 * nsample_k) * n_c * n_q),
        transcendentals=0,
        bytes_accessed=int(4 * (8 * n_q + 8 * n_c + 8 * n_q)))

    out_slab = pl.pallas_call(
        kernel,
        out_shape=jax.ShapeDtypeStruct((8, n_q), jnp.float32),
        grid=(num_tiles,),
        in_specs=[
            pl.BlockSpec((8, tile_m), lambda i: (0, i)),          # query tile
            # Full candidate block, constant index -> DMA'd once, kept resident.
            # TODO(synk): pipeline_mode=pl.Buffered(1) would drop the unused second
            #             buffer (32*n_c bytes); left off for lowering portability.
            pl.BlockSpec((n_c, 8), lambda i: (0, 0)),
            pl.BlockSpec(memory_space=pltpu.MemorySpace.SMEM),    # [w0, w1, w2, b]
        ],
        out_specs=pl.BlockSpec((8, tile_m), lambda i: (0, i)),    # lane-dense slab
        compiler_params=pltpu.CompilerParams(
            dimension_semantics=("parallel",),    # megacore / 2-TC sharding on v7x
            vmem_limit_bytes=48 * 1024 * 1024),   # headroom inside v7x's 64 MiB
        cost_estimate=cost,
    )(q_mat, c_mat, params)

    return out_slab[0, :n].reshape(n, 1)


def _reference(p, weight, bias, nsample_k=12):
    """Pure-JAX reference of the PyTorch forward (elementwise, no MXU rounding)."""
    B, N, _ = p.shape
    n = B * N
    k = nsample_k - 1
    pf = p.reshape(n, 3).astype(jnp.float32)
    d = jnp.sum((pf[:, None, :] - pf[None, :, :]) ** 2, axis=-1)
    d = d.at[jnp.arange(n), jnp.arange(n)].set(jnp.inf)
    _, idx = lax.top_k(-d, k)                                     # [n, 11]
    nbr = pf[idx]                                                 # [n, 11, 3]
    w = jnp.asarray(weight, jnp.float32).reshape(3)
    b = jnp.asarray(bias, jnp.float32).reshape(())
    p_ij = jnp.concatenate([pf[:, None, :],
                            jnp.abs(pf[:, None, :] - nbr)], axis=1)   # [n, 12, 3]
    h = jnp.sum(p_ij * w[None, None, :], axis=-1)                 # [n, 12]
    emb0 = h[:, :1] + b
    embj = (1.0 / jnp.sqrt(2.0)) * h[:, :1] + 0.5 * h[:, 1:] + b
    emb = jnp.concatenate([emb0, embj], axis=1)                   # [n, 12]
    return jnp.mean(emb, axis=1, keepdims=True)                   # [n, 1]


if __name__ == "__main__":
    key = jax.random.PRNGKey(0)
    kp, kw, kb = jax.random.split(key, 3)

    # Small shape that exercises both query padding (140 -> 256 lanes, 2 tiles at
    # TM=128) and candidate padding (140 -> 144 sublanes).
    B, N = 2, 70
    p = jax.random.normal(kp, (B, N, 3), dtype=jnp.float32)

    # GCNConv(3, 1) parameters: glorot-style weight [3, 1], scalar bias.
    weight = jax.random.normal(kw, (3, 1), dtype=jnp.float32) * math.sqrt(6.0 / (3 + 1))
    bias = jax.random.normal(kb, (), dtype=jnp.float32) * 0.1

    out = apm_p_graph_forward(p, weight, bias)
    out = jax.block_until_ready(out)

    ref = _reference(p, weight, bias)
    assert out.shape == (B * N, 1), out.shape
    if not jnp.allclose(out, ref, atol=1e-4, rtol=1e-4):
        err = float(jnp.max(jnp.abs(out - ref)))
        raise AssertionError(f"Pallas kernel does not match JAX reference (max abs err {err})")
    print("KERNEL_OK")
</pallas_src>

<mosaic_0001>
module attributes {stable_mosaic.version = 11 : i64} {
  func.func @_apm_p_graph_kernel(%arg0: i32, %arg1: memref<8x128xf32, #tpu.memory_space<vmem>>, %arg2: memref<144x8xf32, #tpu.memory_space<vmem>>, %arg3: memref<4xf32, #tpu.memory_space<smem>>, %arg4: memref<8x128xf32, #tpu.memory_space<vmem>>) attributes {dimension_semantics = [#tpu.dimension_semantics<parallel>], iteration_bounds = array<i64: 2>, scalar_prefetch = 0 : i64, scratch_operands = 0 : i64, tpu.core_type = #tpu.core_type<tc>, window_params = [{transform_indices = @transform_0, window_bounds = array<i64: 8, 128>}, {pipeline_mode = #tpu.pipeline_mode<synchronous>, transform_indices = @transform_1, window_bounds = array<i64: 144, 8>}, {transform_indices = @transform_2, window_bounds = array<i64: 4>}, {transform_indices = @transform_3, window_bounds = array<i64: 8, 128>}]} {
    %c0 = arith.constant 0 : index
    %c0_0 = arith.constant 0 : index
    %0 = vector.load %arg1[%c0, %c0_0] : memref<8x128xf32, #tpu.memory_space<vmem>>, vector<8x128xf32>
    %c0_1 = arith.constant 0 : index
    %c0_2 = arith.constant 0 : index
    %1 = vector.load %arg2[%c0_1, %c0_2] : memref<144x8xf32, #tpu.memory_space<vmem>>, vector<144x8xf32>
    %c0_3 = arith.constant 0 : index
    %2 = memref.load %arg3[%c0_3] : memref<4xf32, #tpu.memory_space<smem>>
    %c1 = arith.constant 1 : index
    %3 = memref.load %arg3[%c1] : memref<4xf32, #tpu.memory_space<smem>>
    %c2 = arith.constant 2 : index
    %4 = memref.load %arg3[%c2] : memref<4xf32, #tpu.memory_space<smem>>
    %c3 = arith.constant 3 : index
    %5 = memref.load %arg3[%c3] : memref<4xf32, #tpu.memory_space<smem>>
    %6 = vector.extract_strided_slice %0 {offsets = [0, 0], sizes = [1, 128], strides = [1, 1]} : vector<8x128xf32> to vector<1x128xf32>
    %7 = vector.extract_strided_slice %0 {offsets = [1, 0], sizes = [1, 128], strides = [1, 1]} : vector<8x128xf32> to vector<1x128xf32>
    %8 = vector.extract_strided_slice %0 {offsets = [2, 0], sizes = [1, 128], strides = [1, 1]} : vector<8x128xf32> to vector<1x128xf32>
    %9 = vector.extract_strided_slice %1 {offsets = [0, 0], sizes = [144, 1], strides = [1, 1]} : vector<144x8xf32> to vector<144x1xf32>
    %10 = vector.extract_strided_slice %1 {offsets = [0, 1], sizes = [144, 1], strides = [1, 1]} : vector<144x8xf32> to vector<144x1xf32>
    %11 = vector.extract_strided_slice %1 {offsets = [0, 2], sizes = [144, 1], strides = [1, 1]} : vector<144x8xf32> to vector<144x1xf32>
    %12 = vector.broadcast %9 : vector<144x1xf32> to vector<144x128xf32>
    %13 = vector.broadcast %6 : vector<1x128xf32> to vector<144x128xf32>
    %14 = arith.subf %12, %13 : vector<144x128xf32>
    %15 = arith.mulf %14, %14 : vector<144x128xf32>
    %16 = vector.broadcast %2 : f32 to vector<1x128xf32>
    %17 = arith.mulf %16, %6 : vector<1x128xf32>
    %18 = vector.broadcast %10 : vector<144x1xf32> to vector<144x128xf32>
    %19 = vector.broadcast %7 : vector<1x128xf32> to vector<144x128xf32>
    %20 = arith.subf %18, %19 : vector<144x128xf32>
    %21 = arith.mulf %20, %20 : vector<144x128xf32>
    %22 = arith.addf %15, %21 : vector<144x128xf32>
    %23 = vector.broadcast %3 : f32 to vector<1x128xf32>
    %24 = arith.mulf %23, %7 : vector<1x128xf32>
    %25 = arith.addf %17, %24 : vector<1x128xf32>
    %26 = vector.broadcast %11 : vector<144x1xf32> to vector<144x128xf32>
    %27 = vector.broadcast %8 : vector<1x128xf32> to vector<144x128xf32>
    %28 = arith.subf %26, %27 : vector<144x128xf32>
    %29 = arith.mulf %28, %28 : vector<144x128xf32>
    %30 = arith.addf %22, %29 : vector<144x128xf32>
    %31 = vector.broadcast %4 : f32 to vector<1x128xf32>
    %32 = arith.mulf %31, %8 : vector<1x128xf32>
    %33 = arith.addf %25, %32 : vector<1x128xf32>
    %cst = arith.constant 0.000000e+00 : f32
    %cst_4 = arith.constant 0x7F800000 : f32
    %34 = arith.subf %cst, %cst_4 : f32
    %35 = vector.broadcast %34 : f32 to vector<1x128xf32>
    %cst_5 = arith.constant 0x7F800000 : f32
    %c0_i32 = arith.constant 0 : i32
    %36 = vector.broadcast %35 : vector<1x128xf32> to vector<144x128xf32>
    %37 = arith.cmpf ogt, %30, %36 : vector<144x128xf32>
    %38 = vector.broadcast %cst_5 : f32 to vector<144x128xf32>
    %39 = arith.select %37, %30, %38 : vector<144x128xi1>, vector<144x128xf32>
    %cst_6 = arith.constant dense<0x7F800000> : vector<128xf32>
    %40 = vector.multi_reduction <minimumf>, %39, %cst_6 [0] : vector<144x128xf32> to vector<128xf32>
    %41 = vector.shape_cast %40 : vector<128xf32> to vector<1x128xf32>
    %c1_i32 = arith.constant 1 : i32
    %42 = vector.broadcast %41 : vector<1x128xf32> to vector<144x128xf32>
    %43 = arith.cmpf ogt, %30, %42 : vector<144x128xf32>
    %44 = vector.broadcast %cst_5 : f32 to vector<144x128xf32>
    %45 = arith.select %43, %30, %44 : vector<144x128xi1>, vector<144x128xf32>
    %cst_7 = arith.constant dense<0x7F800000> : vector<128xf32>
    %46 = vector.multi_reduction <minimumf>, %45, %cst_7 [0] : vector<144x128xf32> to vector<128xf32>
    %47 = vector.shape_cast %46 : vector<128xf32> to vector<1x128xf32>
    %c2_i32 = arith.constant 2 : i32
    %48 = vector.broadcast %47 : vector<1x128xf32> to vector<144x128xf32>
    %49 = arith.cmpf ogt, %30, %48 : vector<144x128xf32>
    %50 = vector.broadcast %cst_5 : f32 to vector<144x128xf32>
    %51 = arith.select %49, %30, %50 : vector<144x128xi1>, vector<144x128xf32>
    %cst_8 = arith.constant dense<0x7F800000> : vector<128xf32>
    %52 = vector.multi_reduction <minimumf>, %51, %cst_8 [0] : vector<144x128xf32> to vector<128xf32>
    %53 = vector.shape_cast %52 : vector<128xf32> to vector<1x128xf32>
    %c3_i32 = arith.constant 3 : i32
    %54 = vector.broadcast %53 : vector<1x128xf32> to vector<144x128xf32>
    %55 = arith.cmpf ogt, %30, %54 : vector<144x128xf32>
    %56 = vector.broadcast %cst_5 : f32 to vector<144x128xf32>
    %57 = arith.select %55, %30, %56 : vector<144x128xi1>, vector<144x128xf32>
    %cst_9 = arith.constant dense<0x7F800000> : vector<128xf32>
    %58 = vector.multi_reduction <minimumf>, %57, %cst_9 [0] : vector<144x128xf32> to vector<128xf32>
    %59 = vector.shape_cast %58 : vector<128xf32> to vector<1x128xf32>
    %c4_i32 = arith.constant 4 : i32
    %60 = vector.broadcast %59 : vector<1x128xf32> to vector<144x128xf32>
    %61 = arith.cmpf ogt, %30, %60 : vector<144x128xf32>
    %62 = vector.broadcast %cst_5 : f32 to vector<144x128xf32>
    %63 = arith.select %61, %30, %62 : vector<144x128xi1>, vector<144x128xf32>
    %cst_10 = arith.constant dense<0x7F800000> : vector<128xf32>
    %64 = vector.multi_reduction <minimumf>, %63, %cst_10 [0] : vector<144x128xf32> to vector<128xf32>
    %65 = vector.shape_cast %64 : vector<128xf32> to vector<1x128xf32>
    %c5_i32 = arith.constant 5 : i32
    %66 = vector.broadcast %65 : vector<1x128xf32> to vector<144x128xf32>
    %67 = arith.cmpf ogt, %30, %66 : vector<144x128xf32>
    %68 = vector.broadcast %cst_5 : f32 to vector<144x128xf32>
    %69 = arith.select %67, %30, %68 : vector<144x128xi1>, vector<144x128xf32>
    %cst_11 = arith.constant dense<0x7F800000> : vector<128xf32>
    %70 = vector.multi_reduction <minimumf>, %69, %cst_11 [0] : vector<144x128xf32> to vector<128xf32>
    %71 = vector.shape_cast %70 : vector<128xf32> to vector<1x128xf32>
    %c6_i32 = arith.constant 6 : i32
    %72 = vector.broadcast %71 : vector<1x128xf32> to vector<144x128xf32>
    %73 = arith.cmpf ogt, %30, %72 : vector<144x128xf32>
    %74 = vector.broadcast %cst_5 : f32 to vector<144x128xf32>
    %75 = arith.select %73, %30, %74 : vector<144x128xi1>, vector<144x128xf32>
    %cst_12 = arith.constant dense<0x7F800000> : vector<128xf32>
    %76 = vector.multi_reduction <minimumf>, %75, %cst_12 [0] : vector<144x128xf32> to vector<128xf32>
    %77 = vector.shape_cast %76 : vector<128xf32> to vector<1x128xf32>
    %c7_i32 = arith.constant 7 : i32
    %78 = vector.broadcast %77 : vector<1x128xf32> to vector<144x128xf32>
    %79 = arith.cmpf ogt, %30, %78 : vector<144x128xf32>
    %80 = vector.broadcast %cst_5 : f32 to vector<144x128xf32>
    %81 = arith.select %79, %30, %80 : vector<144x128xi1>, vector<144x128xf32>
    %cst_13 = arith.constant dense<0x7F800000> : vector<128xf32>
    %82 = vector.multi_reduction <minimumf>, %81, %cst_13 [0] : vector<144x128xf32> to vector<128xf32>
    %83 = vector.shape_cast %82 : vector<128xf32> to vector<1x128xf32>
    %c8_i32 = arith.constant 8 : i32
    %84 = vector.broadcast %83 : vector<1x128xf32> to vector<144x128xf32>
    %85 = arith.cmpf ogt, %30, %84 : vector<144x128xf32>
    %86 = vector.broadcast %cst_5 : f32 to vector<144x128xf32>
    %87 = arith.select %85, %30, %86 : vector<144x128xi1>, vector<144x128xf32>
    %cst_14 = arith.constant dense<0x7F800000> : vector<128xf32>
    %88 = vector.multi_reduction <minimumf>, %87, %cst_14 [0] : vector<144x128xf32> to vector<128xf32>
    %89 = vector.shape_cast %88 : vector<128xf32> to vector<1x128xf32>
    %c9_i32 = arith.constant 9 : i32
    %90 = vector.broadcast %89 : vector<1x128xf32> to vector<144x128xf32>
    %91 = arith.cmpf ogt, %30, %90 : vector<144x128xf32>
    %92 = vector.broadcast %cst_5 : f32 to vector<144x128xf32>
    %93 = arith.select %91, %30, %92 : vector<144x128xi1>, vector<144x128xf32>
    %cst_15 = arith.constant dense<0x7F800000> : vector<128xf32>
    %94 = vector.multi_reduction <minimumf>, %93, %cst_15 [0] : vector<144x128xf32> to vector<128xf32>
    %95 = vector.shape_cast %94 : vector<128xf32> to vector<1x128xf32>
    %c10_i32 = arith.constant 10 : i32
    %96 = vector.broadcast %95 : vector<1x128xf32> to vector<144x128xf32>
    %97 = arith.cmpf ogt, %30, %96 : vector<144x128xf32>
    %98 = vector.broadcast %cst_5 : f32 to vector<144x128xf32>
    %99 = arith.select %97, %30, %98 : vector<144x128xi1>, vector<144x128xf32>
    %cst_16 = arith.constant dense<0x7F800000> : vector<128xf32>
    %100 = vector.multi_reduction <minimumf>, %99, %cst_16 [0] : vector<144x128xf32> to vector<128xf32>
    %101 = vector.shape_cast %100 : vector<128xf32> to vector<1x128xf32>
    %c11_i32 = arith.constant 11 : i32
    %102 = vector.broadcast %101 : vector<1x128xf32> to vector<144x128xf32>
    %103 = arith.cmpf ogt, %30, %102 : vector<144x128xf32>
    %104 = vector.broadcast %cst_5 : f32 to vector<144x128xf32>
    %105 = arith.select %103, %30, %104 : vector<144x128xi1>, vector<144x128xf32>
    %cst_17 = arith.constant dense<0x7F800000> : vector<128xf32>
    %106 = vector.multi_reduction <minimumf>, %105, %cst_17 [0] : vector<144x128xf32> to vector<128xf32>
    %107 = vector.shape_cast %106 : vector<128xf32> to vector<1x128xf32>
    %108 = vector.broadcast %107 : vector<1x128xf32> to vector<144x128xf32>
    %109 = arith.cmpf ole, %30, %108 : vector<144x128xf32>
    %110 = vector.broadcast %9 : vector<144x1xf32> to vector<144x128xf32>
    %111 = vector.broadcast %6 : vector<1x128xf32> to vector<144x128xf32>
    %112 = arith.subf %110, %111 : vector<144x128xf32>
    %113 = math.absf %112 : vector<144x128xf32>
    %cst_18 = arith.constant 0.000000e+00 : f32
    %114 = vector.broadcast %cst_18 : f32 to vector<144x128xf32>
    %115 = arith.select %109, %113, %114 : vector<144x128xi1>, vector<144x128xf32>
    %cst_19 = arith.constant dense<0.000000e+00> : vector<128xf32>
    %116 = vector.multi_reduction <add>, %115, %cst_19 [0] : vector<144x128xf32> to vector<128xf32>
    %117 = vector.shape_cast %116 : vector<128xf32> to vector<1x128xf32>
    %118 = vector.broadcast %2 : f32 to vector<1x128xf32>
    %119 = arith.mulf %118, %117 : vector<1x128xf32>
    %120 = vector.broadcast %10 : vector<144x1xf32> to vector<144x128xf32>
    %121 = vector.broadcast %7 : vector<1x128xf32> to vector<144x128xf32>
    %122 = arith.subf %120, %121 : vector<144x128xf32>
    %123 = math.absf %122 : vector<144x128xf32>
    %cst_20 = arith.constant 0.000000e+00 : f32
    %124 = vector.broadcast %cst_20 : f32 to vector<144x128xf32>
    %125 = arith.select %109, %123, %124 : vector<144x128xi1>, vector<144x128xf32>
    %cst_21 = arith.constant dense<0.000000e+00> : vector<128xf32>
    %126 = vector.multi_reduction <add>, %125, %cst_21 [0] : vector<144x128xf32> to vector<128xf32>
    %127 = vector.shape_cast %126 : vector<128xf32> to vector<1x128xf32>
    %128 = vector.broadcast %3 : f32 to vector<1x128xf32>
    %129 = arith.mulf %128, %127 : vector<1x128xf32>
    %130 = arith.addf %119, %129 : vector<1x128xf32>
    %131 = vector.broadcast %11 : vector<144x1xf32> to vector<144x128xf32>
    %132 = vector.broadcast %8 : vector<1x128xf32> to vector<144x128xf32>
    %133 = arith.subf %131, %132 : vector<144x128xf32>
    %134 = math.absf %133 : vector<144x128xf32>
    %cst_22 = arith.constant 0.000000e+00 : f32
    %135 = vector.broadcast %cst_22 : f32 to vector<144x128xf32>
    %136 = arith.select %109, %134, %135 : vector<144x128xi1>, vector<144x128xf32>
    %cst_23 = arith.constant dense<0.000000e+00> : vector<128xf32>
    %137 = vector.multi_reduction <add>, %136, %cst_23 [0] : vector<144x128xf32> to vector<128xf32>
    %138 = vector.shape_cast %137 : vector<128xf32> to vector<1x128xf32>
    %139 = vector.broadcast %4 : f32 to vector<1x128xf32>
    %140 = arith.mulf %139, %138 : vector<1x128xf32>
    %141 = arith.addf %130, %140 : vector<1x128xf32>
    %cst_24 = arith.constant 1.100000e+01 : f32
    %cst_25 = arith.constant 0.707106769 : f32
    %142 = arith.mulf %cst_24, %cst_25 : f32
    %cst_26 = arith.constant 1.000000e+00 : f32
    %143 = arith.addf %cst_26, %142 : f32
    %144 = vector.broadcast %143 : f32 to vector<1x128xf32>
    %145 = arith.mulf %144, %33 : vector<1x128xf32>
    %cst_27 = arith.constant 5.000000e-01 : f32
    %146 = vector.broadcast %cst_27 : f32 to vector<1x128xf32>
    %147 = arith.mulf %146, %141 : vector<1x128xf32>
    %148 = arith.addf %145, %147 : vector<1x128xf32>
    %cst_28 = arith.constant 1.200000e+01 : f32
    %149 = arith.mulf %cst_28, %5 : f32
    %150 = vector.broadcast %149 : f32 to vector<1x128xf32>
    %151 = arith.addf %148, %150 : vector<1x128xf32>
    %cst_29 = arith.constant 1.200000e+01 : f32
    %152 = vector.broadcast %cst_29 : f32 to vector<1x128xf32>
    %153 = arith.divf %151, %152 : vector<1x128xf32>
    %154 = vector.shape_cast %153 : vector<1x128xf32> to vector<1x128xf32>
    %155 = vector.broadcast %154 : vector<1x128xf32> to vector<8x128xf32>
    %c0_30 = arith.constant 0 : index
    %c0_31 = arith.constant 0 : index
    %156 = vector.load %arg4[%c0_30, %c0_31] : memref<8x128xf32, #tpu.memory_space<vmem>>, vector<8x128xf32>
    tpu.vector_store %arg4[%c0_30, %c0_31], %155 {strides = array<i32>} : memref<8x128xf32, #tpu.memory_space<vmem>>, vector<8x128xf32>,
    return
  }
  func.func @transform_0(%arg0: i32) -> (i32, i32) {
    %c0_i32 = arith.constant 0 : i32
    %c0_i32_0 = arith.constant 0 : i32
    return %c0_i32, %arg0 : i32, i32
  }
  func.func @transform_1(%arg0: i32) -> (i32, i32) {
    %c0_i32 = arith.constant 0 : i32
    %c0_i32_0 = arith.constant 0 : i32
    %c0_i32_1 = arith.constant 0 : i32
    return %c0_i32, %c0_i32_0 : i32, i32
  }
  func.func @transform_2(%arg0: i32) -> i32 {
    %c0_i32 = arith.constant 0 : i32
    %c0_i32_0 = arith.constant 0 : i32
    return %c0_i32 : i32
  }
  func.func @transform_3(%arg0: i32) -> (i32, i32) {
    %c0_i32 = arith.constant 0 : i32
    %c0_i32_0 = arith.constant 0 : i32
    return %c0_i32, %arg0 : i32, i32
  }
}

</mosaic_0001>

<llo_original>
// kernel: tpu_custom_call.1
$region0: #{tpu_custom_call.1}
  #allocation0 [shape = 'u32[]', space=smem, size = 0x4, offset = 0x4, fixed_abs, tag = 'smem constant byte address 0x4 - core index']
  #allocation1 [shape = 'u32[144,128]{1,0:T(1,128)}', space=vmem, size = 0x12000, scoped, tag = 'internal scratch']
  %s0 = inlined_call_operand.vmem [shape: f32[8,256], index: 0, kind: input, shape index: {}]
  %s1 = inlined_call_operand.vmem [shape: f32[144,8], index: 1, kind: input, shape index: {}]
  %s2 = inlined_call_operand.vmem [shape: f32[4], index: 2, kind: input, shape index: {}]
  %s3 = inlined_call_operand.hbm [shape: f32[8,256], index: 3, kind: output, shape index: {}]
  %s4 = sld [smem:[#allocation0]]
  $region49: #{tpu_custom_call.1} parent=0
    _
  %s6 = ssub.s32 1, %s4
  %s7 = scalar_select 0, %s6, %s4
  $region1: #{tpu_custom_call.1} parent=0
    #allocation2 [shape = 'u8[512]{0}', space=smem, size = 0x200, scoped, tag = 'input window, operand 2, single buffered']
    #allocation3 [shape = 's32[2]{0}', space=sflag, size = 0x8, scoped, tag = 'scoped memory for tpu_custom_call.1']
    #allocation4 [shape = 's32[2]{0}', space=sflag, size = 0x8, scoped, tag = 'scoped memory for tpu_custom_call.1']
    #allocation5 [shape = 'u8[8192]{0}', space=vmem, size = 0x2000, scoped, tag = 'output window, operand 0']
    %8 = vsyncpa [#allocation4], 0
    %9 = vsyncpa [#allocation3], 0
    %s10 = scalar_lea.sflag [#allocation3], 1
    %11 = vsyncpa %s10, 0
    loop: start=0, step=1, limit=4
    $region2: #{tpu_custom_call.1} parent=1 // loop_pre_header
      _
    $region3: #{tpu_custom_call.1} parent=1 // loop_header
      %s13 = sphi 0, %s17
      %p14 = scmp.ge.s32.totalorder %s13, 4
      %s23 = sphi 0, %s25
      %s26 = sphi 0, %s23
      %s27 = sphi 0, %s26
      %s43 = sphi 0, %s27
      %s47 = sphi 0, %s47
      %s49 = sphi 0, %s47
      %s50 = sphi 0, %s49
      %s64 = sphi 0, %s50
      %s68 = sphi 0, %s68
      %s70 = sphi 0, %s68
      %s71 = sphi 0, %s70
      %s85 = sphi 0, %s71
      %s91 = sphi 0, %s93
      %s94 = sphi 0, %s91
      %s95 = sphi 0, %s94
      %s111 = sphi 0, %s95
    $region4: #{tpu_custom_call.1} parent=1 // loop_header_branch
      %16 = sbr.rel (%p14) target = $region8
    $region5: #{tpu_custom_call.1} parent=1 // loop_body
      %s18 = ssub.s32 %s13, 1
      %s19 = ssub.s32 %s13, 2
      %s20 = sadd.s32 %s13, 1
      %s21 = ssub.s32 %s13, %s20
      %p22 = scmp.eq.s32.totalorder %s21, 0
      %s24 = sadd.s32 %s23, 1
      %s25 = scalar_select %p22, %s23, %s24
      %p28 = pneg %p22
      %p29 = scmp.eq.s32.totalorder %s13, 1
      %p30 = por %p28, %p29
      %p31 = scmp.ne.s32.totalorder %s23, %s26
      %p32 = scmp.eq.s32.totalorder %s13, 0
      %p33 = por %p31, %p32
      %p34 = scmp.ne.s32.totalorder %s23, %s26
      %p35 = scmp.eq.s32.totalorder %s18, 1
      %p36 = por %p34, %p35
      %p37 = scmp.ne.s32.totalorder %s26, %s27
      %p38 = scmp.eq.s32.totalorder %s18, 0
      %p39 = por %p37, %p38
      %p40 = scmp.ne.s32.totalorder %s26, %s27
      %p41 = scmp.eq.s32.totalorder %s19, 1
      %p42 = por %p40, %p41
      %p44 = scmp.ne.s32.totalorder %s27, %s43
      %p45 = scmp.eq.s32.totalorder %s19, 0
      %p46 = por %p44, %p45
      %s48 = sadd.s32 %s47, 1
      %p51 = scmp.eq.s32.totalorder %s13, 1
      %p52 = scmp.ne.s32.totalorder %s47, %s49
      %p53 = scmp.eq.s32.totalorder %s13, 0
      %p54 = por %p52, %p53
      %p55 = scmp.ne.s32.totalorder %s47, %s49
      %p56 = scmp.eq.s32.totalorder %s18, 1
      %p57 = por %p55, %p56
      %p58 = scmp.ne.s32.totalorder %s49, %s50
      %p59 = scmp.eq.s32.totalorder %s18, 0
      %p60 = por %p58, %p59
      %p61 = scmp.ne.s32.totalorder %s49, %s50
      %p62 = scmp.eq.s32.totalorder %s19, 1
      %p63 = por %p61, %p62
      %p65 = scmp.ne.s32.totalorder %s50, %s64
      %p66 = scmp.eq.s32.totalorder %s19, 0
      %p67 = por %p65, %p66
      %s69 = sadd.s32 %s68, 1
      %p72 = scmp.eq.s32.totalorder %s13, 1
      %p73 = scmp.ne.s32.totalorder %s68, %s70
      %p74 = scmp.eq.s32.totalorder %s13, 0
      %p75 = por %p73, %p74
      %p76 = scmp.ne.s32.totalorder %s68, %s70
      %p77 = scmp.eq.s32.totalorder %s18, 1
      %p78 = por %p76, %p77
      %p79 = scmp.ne.s32.totalorder %s70, %s71
      %p80 = scmp.eq.s32.totalorder %s18, 0
      %p81 = por %p79, %p80
      %p82 = scmp.ne.s32.totalorder %s70, %s71
      %p83 = scmp.eq.s32.totalorder %s19, 1
      %p84 = por %p82, %p83
      %p86 = scmp.ne.s32.totalorder %s71, %s85
      %p87 = scmp.eq.s32.totalorder %s19, 0
      %p88 = por %p86, %p87
      %s89 = ssub.s32 %s13, %s20
      %p90 = scmp.eq.s32.totalorder %s89, 0
      %s92 = sadd.s32 %s91, 1
      %s93 = scalar_select %p90, %s91, %s92
      %p96 = pneg %p90
      %p97 = scmp.eq.s32.totalorder %s13, 1
      %p98 = por %p96, %p97
      %p99 = scmp.ne.s32.totalorder %s91, %s94
      %p100 = scmp.eq.s32.totalorder %s13, 0
      %p101 = por %p99, %p100
      %p102 = scmp.ne.s32.totalorder %s91, %s94
      %p103 = scmp.eq.s32.totalorder %s18, 1
      %p104 = por %p102, %p103
      %p105 = scmp.ne.s32.totalorder %s94, %s95
      %p106 = scmp.eq.s32.totalorder %s18, 0
      %p107 = por %p105, %p106
      %p108 = scmp.ne.s32.totalorder %s94, %s95
      %p109 = scmp.eq.s32.totalorder %s19, 1
      %p110 = por %p108, %p109
      %p112 = scmp.ne.s32.totalorder %s95, %s111
      %p113 = scmp.eq.s32.totalorder %s19, 0
      %p114 = por %p112, %p113
      %p115 = scmp.le.s32.totalorder 1, %s13
      %p116 = scmp.lt.s32.totalorder %s13, 3
      %p117 = pnand %p115, %p116
      %p118 = pneg %p117
      // Predicated region
      $region9: #{tpu_custom_call.1} parent=5 // pred_check
        _
      $region10: #{tpu_custom_call.1} parent=5 // pred_check_branch
        %120 = sbr.rel (%p117) target = $region12
      $region11: #{tpu_custom_call.1} parent=5 // pred_region
        %s121 = ssub.s32 %s13, 1
        // Predicated region
        $region13: #{tpu_custom_call.1} parent=11 // pred_check
          %p122 = pneg %p60
        $region14: #{tpu_custom_call.1} parent=11 // pred_check_branch
          %124 = sbr.rel (%p122) target = $region16
        $region15: #{tpu_custom_call.1} parent=11 // pred_region
          _
        $region16: #{tpu_custom_call.1} parent=11 // pred_fallthru
          _
        // Predicated region
        $region17: #{tpu_custom_call.1} parent=11 // pred_check
          %p125 = pneg %p81
        $region18: #{tpu_custom_call.1} parent=11 // pred_check_branch
          %127 = sbr.rel (%p125) target = $region20
        $region19: #{tpu_custom_call.1} parent=11 // pred_region
          %s129 = ssub.s32 16, 16
          %130 = vsyncadd [#allocation4], %s129
          %s132 = sshll.u32 %s2, 4
          %s133 = int_to_ptr.vmem [resolvable:$true] %s132
          %135 = dma.vmem_to_smem %s133, 16, [#allocation2], [#allocation4]
        $region20: #{tpu_custom_call.1} parent=11 // pred_fallthru
          _
      $region12: #{tpu_custom_call.1} parent=5 // pred_fallthru
        _
      %p136 = scmp.lt.s32.totalorder %s13, 2
      // Predicated region
      $region21: #{tpu_custom_call.1} parent=5 // pred_check
        %p137 = pneg %p136
      $region22: #{tpu_custom_call.1} parent=5 // pred_check_branch
        %139 = sbr.rel (%p137) target = $region24
      $region23: #{tpu_custom_call.1} parent=5 // pred_region
        // Predicated region
        $region25: #{tpu_custom_call.1} parent=23 // pred_check
          %p140 = pneg %p33
        $region26: #{tpu_custom_call.1} parent=23 // pred_check_branch
          %142 = sbr.rel (%p140) target = $region28
        $region27: #{tpu_custom_call.1} parent=23 // pred_region
          %p143 = scmp.lt.s32.totalorder %s13, 1
          %s144 = scalar_select %p143, %s13, 1
          %s145 = smul.addr %s144, 8
          %s146 = scalar_lea.vmem %s0, %s145
        $region28: #{tpu_custom_call.1} parent=23 // pred_fallthru
          _
      $region24: #{tpu_custom_call.1} parent=5 // pred_fallthru
        _
      %p147 = scmp.le.s32.totalorder 1, %s13
      %p148 = scmp.lt.s32.totalorder %s13, 3
      %p149 = pnand %p147, %p148
      %p150 = pneg %p149
      // Predicated region
      $region29: #{tpu_custom_call.1} parent=5 // pred_check
        _
      $region30: #{tpu_custom_call.1} parent=5 // pred_check_branch
        %152 = sbr.rel (%p149) target = $region32
      $region31: #{tpu_custom_call.1} parent=5 // pred_region
        %s153 = ssub.s32 %s13, 1
        // Predicated region
        $region33: #{tpu_custom_call.1} parent=31 // pred_check
          %p154 = pneg %p81
        $region34: #{tpu_custom_call.1} parent=31 // pred_check_branch
          %156 = sbr.rel (%p154) target = $region36
        $region35: #{tpu_custom_call.1} parent=31 // pred_region
          %157 = dma.done [#allocation4], 16
        $region36: #{tpu_custom_call.1} parent=31 // pred_fallthru
          _
        %158 = sfence
        %p159 = scmp.lt.s32.totalorder %s18, 1
        %s160 = scalar_select %p159, %s18, 1
        %s161 = smul.addr %s160, 8
        %s162 = scalar_lea.vmem %s0, %s161
        %p163 = pneg %p39
        %p164 = pneg %p36
        %p165 = pneg %p60
        %p166 = pneg %p57
        %p167 = pneg %p81
        %p168 = pneg %p78
        %p169 = pneg %p107
        %p170 = pneg %p104
        %s171 = sand.u32 %s94, 1
        %s172 = scalar_lea.sflag [#allocation3], %s171
        %s173 = sand.u32 %s94, 1
        %s174 = smul.addr %s173, 8
        %s175 = scalar_lea.vmem [#allocation5], %s174
        %p176 = scmp.lt.s32.totalorder %s18, 1
        %s177 = scalar_select %p176, %s18, 1
        %s178 = smul.addr %s177, 8
        %s179 = scalar_lea.vmem %s0, %s178
        %v180 = vld [vmem:[%s179] sm:$0xff]
        %v181 = vld [vmem:[%s1] sm:$0xff]
        %v182 = vld [vmem:[%s1 + $0x8] sm:$0xff]
        %v183 = vld [vmem:[%s1 + $0x10] sm:$0xff]
        %v184 = vld [vmem:[%s1 + $0x18] sm:$0xff]
        %v185 = vld [vmem:[%s1 + $0x20] sm:$0xff]
        %v186 = vld [vmem:[%s1 + $0x28] sm:$0xff]
        %v187 = vld [vmem:[%s1 + $0x30] sm:$0xff]
        %v188 = vld [vmem:[%s1 + $0x38] sm:$0xff]
        %v189 = vld [vmem:[%s1 + $0x40] sm:$0xff]
        %v190 = vld [vmem:[%s1 + $0x48] sm:$0xff]
        %v191 = vld [vmem:[%s1 + $0x50] sm:$0xff]
        %v192 = vld [vmem:[%s1 + $0x58] sm:$0xff]
        %v193 = vld [vmem:[%s1 + $0x60] sm:$0xff]
        %v194 = vld [vmem:[%s1 + $0x68] sm:$0xff]
        %v195 = vld [vmem:[%s1 + $0x70] sm:$0xff]
        %v196 = vld [vmem:[%s1 + $0x78] sm:$0xff]
        %v197 = vld [vmem:[%s1 + $0x80] sm:$0xff]
        %v198 = vld [vmem:[%s1 + $0x88] sm:$0xff]
        %s199 = sld [smem:[#allocation2]]
        %s200 = sld [smem:[#allocation2 + $0x1]]
        %s201 = sld [smem:[#allocation2 + $0x2]]
        %s202 = sld [smem:[#allocation2 + $0x3]]
        %204 = vset.pattern.permute.xlu0 0
        %205 = vperm.xlu0 %204, %v181
        %v206 = vpop.permute.xlu0 %205
        %209 = vset.pattern.permute.xlu0 0
        %210 = vperm.xlu0 %209, %v182
        %v211 = vpop.permute.xlu0 %210
        %214 = vset.pattern.permute.xlu0 0
        %215 = vperm.xlu0 %214, %v183
        %v216 = vpop.permute.xlu0 %215
        %219 = vset.pattern.permute.xlu0 0
        %220 = vperm.xlu0 %219, %v184
        %v221 = vpop.permute.xlu0 %220
        %224 = vset.pattern.permute.xlu0 0
        %225 = vperm.xlu0 %224, %v185
        %v226 = vpop.permute.xlu0 %225
        %229 = vset.pattern.permute.xlu0 0
        %230 = vperm.xlu0 %229, %v186
        %v231 = vpop.permute.xlu0 %230
        %234 = vset.pattern.permute.xlu0 0
        %235 = vperm.xlu0 %234, %v187
        %v236 = vpop.permute.xlu0 %235
        %239 = vset.pattern.permute.xlu0 0
        %240 = vperm.xlu0 %239, %v188
        %v241 = vpop.permute.xlu0 %240
        %244 = vset.pattern.permute.xlu0 0
        %245 = vperm.xlu0 %244, %v189
        %v246 = vpop.permute.xlu0 %245
        %249 = vset.pattern.permute.xlu0 0
        %250 = vperm.xlu0 %249, %v190
        %v251 = vpop.permute.xlu0 %250
        %254 = vset.pattern.permute.xlu0 0
        %255 = vperm.xlu0 %254, %v191
        %v256 = vpop.permute.xlu0 %255
        %259 = vset.pattern.permute.xlu0 0
        %260 = vperm.xlu0 %259, %v192
        %v261 = vpop.permute.xlu0 %260
        %264 = vset.pattern.permute.xlu0 0
        %265 = vperm.xlu0 %264, %v193
        %v266 = vpop.permute.xlu0 %265
        %269 = vset.pattern.permute.xlu0 0
        %270 = vperm.xlu0 %269, %v194
        %v271 = vpop.permute.xlu0 %270
        %274 = vset.pattern.permute.xlu0 0
        %275 = vperm.xlu0 %274, %v195
        %v276 = vpop.permute.xlu0 %275
        %279 = vset.pattern.permute.xlu0 0
        %280 = vperm.xlu0 %279, %v196
        %v281 = vpop.permute.xlu0 %280
        %284 = vset.pattern.permute.xlu0 0
        %285 = vperm.xlu0 %284, %v197
        %v286 = vpop.permute.xlu0 %285
        %289 = vset.pattern.permute.xlu0 0
        %290 = vperm.xlu0 %289, %v198
        %v291 = vpop.permute.xlu0 %290
        %v293 = vlaneseq
        %v294 = vshrl.u32 %v293, 7
        %v295 = vsub.s32 0, %v294
        %v296 = vrot.slane %v180, %v295
        %v297 = vsub.f32 %v206, %v296
        %v298 = vsub.f32 %v211, %v296
        %v299 = vsub.f32 %v216, %v296
        %v300 = vsub.f32 %v221, %v296
        %v301 = vsub.f32 %v226, %v296
        %v302 = vsub.f32 %v231, %v296
        %v303 = vsub.f32 %v236, %v296
        %v304 = vsub.f32 %v241, %v296
        %v305 = vsub.f32 %v246, %v296
        %v306 = vsub.f32 %v251, %v296
        %v307 = vsub.f32 %v256, %v296
        %v308 = vsub.f32 %v261, %v296
        %v309 = vsub.f32 %v266, %v296
        %v310 = vsub.f32 %v271, %v296
        %v311 = vsub.f32 %v276, %v296
        %v312 = vsub.f32 %v281, %v296
        %v313 = vsub.f32 %v286, %v296
        %v314 = vsub.f32 %v291, %v296
        %v315 = vmul.f32 %v297, %v297
        %v316 = vmul.f32 %v298, %v298
        %v317 = vmul.f32 %v299, %v299
        %v318 = vmul.f32 %v300, %v300
        %v319 = vmul.f32 %v301, %v301
        %v320 = vmul.f32 %v302, %v302
        %v321 = vmul.f32 %v303, %v303
        %v322 = vmul.f32 %v304, %v304
        %v323 = vmul.f32 %v305, %v305
        %v324 = vmul.f32 %v306, %v306
        %v325 = vmul.f32 %v307, %v307
        %v326 = vmul.f32 %v308, %v308
        %v327 = vmul.f32 %v309, %v309
        %v328 = vmul.f32 %v310, %v310
        %v329 = vmul.f32 %v311, %v311
        %v330 = vmul.f32 %v312, %v312
        %v331 = vmul.f32 %v313, %v313
        %v332 = vmul.f32 %v314, %v314
        %v333 = vstv %s199
        %v334 = vmul.f32 %v333, %v180
        %335 = vset.pattern.permute.xlu0 1
        %336 = vperm.xlu0 %335, %v181
        %v337 = vpop.permute.xlu0 %336
        %339 = vset.pattern.permute.xlu0 1
        %340 = vperm.xlu0 %339, %v182
        %v341 = vpop.permute.xlu0 %340
        %343 = vset.pattern.permute.xlu0 1
        %344 = vperm.xlu0 %343, %v183
        %v345 = vpop.permute.xlu0 %344
        %347 = vset.pattern.permute.xlu0 1
        %348 = vperm.xlu0 %347, %v184
        %v349 = vpop.permute.xlu0 %348
        %351 = vset.pattern.permute.xlu0 1
        %352 = vperm.xlu0 %351, %v185
        %v353 = vpop.permute.xlu0 %352
        %355 = vset.pattern.permute.xlu0 1
        %356 = vperm.xlu0 %355, %v186
        %v357 = vpop.permute.xlu0 %356
        %359 = vset.pattern.permute.xlu0 1
        %360 = vperm.xlu0 %359, %v187
        %v361 = vpop.permute.xlu0 %360
        %363 = vset.pattern.permute.xlu0 1
        %364 = vperm.xlu0 %363, %v188
        %v365 = vpop.permute.xlu0 %364
        %367 = vset.pattern.permute.xlu0 1
        %368 = vperm.xlu0 %367, %v189
        %v369 = vpop.permute.xlu0 %368
        %371 = vset.pattern.permute.xlu0 1
        %372 = vperm.xlu0 %371, %v190
        %v373 = vpop.permute.xlu0 %372
        %375 = vset.pattern.permute.xlu0 1
        %376 = vperm.xlu0 %375, %v191
        %v377 = vpop.permute.xlu0 %376
        %379 = vset.pattern.permute.xlu0 1
        %380 = vperm.xlu0 %379, %v192
        %v381 = vpop.permute.xlu0 %380
        %383 = vset.pattern.permute.xlu0 1
        %384 = vperm.xlu0 %383, %v193
        %v385 = vpop.permute.xlu0 %384
        %387 = vset.pattern.permute.xlu0 1
        %388 = vperm.xlu0 %387, %v194
        %v389 = vpop.permute.xlu0 %388
        %391 = vset.pattern.permute.xlu0 1
        %392 = vperm.xlu0 %391, %v195
        %v393 = vpop.permute.xlu0 %392
        %395 = vset.pattern.permute.xlu0 1
        %396 = vperm.xlu0 %395, %v196
        %v397 = vpop.permute.xlu0 %396
        %399 = vset.pattern.permute.xlu0 1
        %400 = vperm.xlu0 %399, %v197
        %v401 = vpop.permute.xlu0 %400
        %403 = vset.pattern.permute.xlu0 1
        %404 = vperm.xlu0 %403, %v198
        %v405 = vpop.permute.xlu0 %404
        %v407 = vlaneseq
        %v408 = vshrl.u32 %v407, 7
        %v409 = vsub.s32 1, %v408
        %v410 = vrot.slane %v180, %v409
        %v411 = vsub.f32 %v337, %v410
        %v412 = vsub.f32 %v341, %v410
        %v413 = vsub.f32 %v345, %v410
        %v414 = vsub.f32 %v349, %v410
        %v415 = vsub.f32 %v353, %v410
        %v416 = vsub.f32 %v357, %v410
        %v417 = vsub.f32 %v361, %v410
        %v418 = vsub.f32 %v365, %v410
        %v419 = vsub.f32 %v369, %v410
        %v420 = vsub.f32 %v373, %v410
        %v421 = vsub.f32 %v377, %v410
        %v422 = vsub.f32 %v381, %v410
        %v423 = vsub.f32 %v385, %v410
        %v424 = vsub.f32 %v389, %v410
        %v425 = vsub.f32 %v393, %v410
        %v426 = vsub.f32 %v397, %v410
        %v427 = vsub.f32 %v401, %v410
        %v428 = vsub.f32 %v405, %v410
        %v429 = vmul.f32 %v411, %v411
        %v430 = vmul.f32 %v412, %v412
        %v431 = vmul.f32 %v413, %v413
        %v432 = vmul.f32 %v414, %v414
        %v433 = vmul.f32 %v415, %v415
        %v434 = vmul.f32 %v416, %v416
        %v435 = vmul.f32 %v417, %v417
        %v436 = vmul.f32 %v418, %v418
        %v437 = vmul.f32 %v419, %v419
        %v438 = vmul.f32 %v420, %v420
        %v439 = vmul.f32 %v421, %v421
        %v440 = vmul.f32 %v422, %v422
        %v441 = vmul.f32 %v423, %v423
        %v442 = vmul.f32 %v424, %v424
        %v443 = vmul.f32 %v425, %v425
        %v444 = vmul.f32 %v426, %v426
        %v445 = vmul.f32 %v427, %v427
        %v446 = vmul.f32 %v428, %v428
        %v447 = vadd.f32 %v315, %v429
        %v448 = vadd.f32 %v316, %v430
        %v449 = vadd.f32 %v317, %v431
        %v450 = vadd.f32 %v318, %v432
        %v451 = vadd.f32 %v319, %v433
        %v452 = vadd.f32 %v320, %v434
        %v453 = vadd.f32 %v321, %v435
        %v454 = vadd.f32 %v322, %v436
        %v455 = vadd.f32 %v323, %v437
        %v456 = vadd.f32 %v324, %v438
        %v457 = vadd.f32 %v325, %v439
        %v458 = vadd.f32 %v326, %v440
        %v459 = vadd.f32 %v327, %v441
        %v460 = vadd.f32 %v328, %v442
        %v461 = vadd.f32 %v329, %v443
        %v462 = vadd.f32 %v330, %v444
        %v463 = vadd.f32 %v331, %v445
        %v464 = vadd.f32 %v332, %v446
        %v465 = vstv %s200
        %v466 = vmul.f32 %v465, %v180
        %v468 = vrot.slane %v466, 1
        %v470 = vadd.f32 %v334, %v468
        %471 = vset.pattern.permute.xlu0 2
        %472 = vperm.xlu0 %471, %v181
        %v473 = vpop.permute.xlu0 %472
        %475 = vset.pattern.permute.xlu0 2
        %476 = vperm.xlu0 %475, %v182
        %v477 = vpop.permute.xlu0 %476
        %479 = vset.pattern.permute.xlu0 2
        %480 = vperm.xlu0 %479, %v183
        %v481 = vpop.permute.xlu0 %480
        %483 = vset.pattern.permute.xlu0 2
        %484 = vperm.xlu0 %483, %v184
        %v485 = vpop.permute.xlu0 %484
        %487 = vset.pattern.permute.xlu0 2
        %488 = vperm.xlu0 %487, %v185
        %v489 = vpop.permute.xlu0 %488
        %491 = vset.pattern.permute.xlu0 2
        %492 = vperm.xlu0 %491, %v186
        %v493 = vpop.permute.xlu0 %492
        %495 = vset.pattern.permute.xlu0 2
        %496 = vperm.xlu0 %495, %v187
        %v497 = vpop.permute.xlu0 %496
        %499 = vset.pattern.permute.xlu0 2
        %500 = vperm.xlu0 %499, %v188
        %v501 = vpop.permute.xlu0 %500
        %503 = vset.pattern.permute.xlu0 2
        %504 = vperm.xlu0 %503, %v189
        %v505 = vpop.permute.xlu0 %504
        %507 = vset.pattern.permute.xlu0 2
        %508 = vperm.xlu0 %507, %v190
        %v509 = vpop.permute.xlu0 %508
        %511 = vset.pattern.permute.xlu0 2
        %512 = vperm.xlu0 %511, %v191
        %v513 = vpop.permute.xlu0 %512
        %515 = vset.pattern.permute.xlu0 2
        %516 = vperm.xlu0 %515, %v192
        %v517 = vpop.permute.xlu0 %516
        %519 = vset.pattern.permute.xlu0 2
        %520 = vperm.xlu0 %519, %v193
        %v521 = vpop.permute.xlu0 %520
        %523 = vset.pattern.permute.xlu0 2
        %524 = vperm.xlu0 %523, %v194
        %v525 = vpop.permute.xlu0 %524
        %527 = vset.pattern.permute.xlu0 2
        %528 = vperm.xlu0 %527, %v195
        %v529 = vpop.permute.xlu0 %528
        %531 = vset.pattern.permute.xlu0 2
        %532 = vperm.xlu0 %531, %v196
        %v533 = vpop.permute.xlu0 %532
        %535 = vset.pattern.permute.xlu0 2
        %536 = vperm.xlu0 %535, %v197
        %v537 = vpop.permute.xlu0 %536
        %539 = vset.pattern.permute.xlu0 2
        %540 = vperm.xlu0 %539, %v198
        %v541 = vpop.permute.xlu0 %540
        %v543 = vlaneseq
        %v544 = vshrl.u32 %v543, 7
        %v545 = vsub.s32 2, %v544
        %v546 = vrot.slane %v180, %v545
        %v547 = vsub.f32 %v473, %v546
        %v548 = vsub.f32 %v477, %v546
        %v549 = vsub.f32 %v481, %v546
        %v550 = vsub.f32 %v485, %v546
        %v551 = vsub.f32 %v489, %v546
        %v552 = vsub.f32 %v493, %v546
        %v553 = vsub.f32 %v497, %v546
        %v554 = vsub.f32 %v501, %v546
        %v555 = vsub.f32 %v505, %v546
        %v556 = vsub.f32 %v509, %v546
        %v557 = vsub.f32 %v513, %v546
        %v558 = vsub.f32 %v517, %v546
        %v559 = vsub.f32 %v521, %v546
        %v560 = vsub.f32 %v525, %v546
        %v561 = vsub.f32 %v529, %v546
        %v562 = vsub.f32 %v533, %v546
        %v563 = vsub.f32 %v537, %v546
        %v564 = vsub.f32 %v541, %v546
        %v565 = vmul.f32 %v547, %v547
        %v566 = vmul.f32 %v548, %v548
        %v567 = vmul.f32 %v549, %v549
        %v568 = vmul.f32 %v550, %v550
        %v569 = vmul.f32 %v551, %v551
        %v570 = vmul.f32 %v552, %v552
        %v571 = vmul.f32 %v553, %v553
        %v572 = vmul.f32 %v554, %v554
        %v573 = vmul.f32 %v555, %v555
        %v574 = vmul.f32 %v556, %v556
        %v575 = vmul.f32 %v557, %v557
        %v576 = vmul.f32 %v558, %v558
        %v577 = vmul.f32 %v559, %v559
        %v578 = vmul.f32 %v560, %v560
        %v579 = vmul.f32 %v561, %v561
        %v580 = vmul.f32 %v562, %v562
        %v581 = vmul.f32 %v563, %v563
        %v582 = vmul.f32 %v564, %v564
        %v583 = vadd.f32 %v447, %v565
        %v584 = vadd.f32 %v448, %v566
        %v585 = vadd.f32 %v449, %v567
        %v586 = vadd.f32 %v450, %v568
        %v587 = vadd.f32 %v451, %v569
        %v588 = vadd.f32 %v452, %v570
        %v589 = vadd.f32 %v453, %v571
        %v590 = vadd.f32 %v454, %v572
        %v591 = vadd.f32 %v455, %v573
        %v592 = vadd.f32 %v456, %v574
        %v593 = vadd.f32 %v457, %v575
        %v594 = vadd.f32 %v458, %v576
        %v595 = vadd.f32 %v459, %v577
        %v596 = vadd.f32 %v460, %v578
        %v597 = vadd.f32 %v461, %v579
        %v598 = vadd.f32 %v462, %v580
        %v599 = vadd.f32 %v463, %v581
        %v600 = vadd.f32 %v464, %v582
        %v601 = vstv %s201
        %v602 = vmul.f32 %v601, %v180
        %v604 = vrot.slane %v602, 2
        %v606 = vadd.f32 %v470, %v604
        %vm607 = vcmp.gt.f32.partialorder %v583, -inf
        %vm608 = vcmp.gt.f32.partialorder %v584, -inf
        %vm609 = vcmp.gt.f32.partialorder %v585, -inf
        %vm610 = vcmp.gt.f32.partialorder %v586, -inf
        %vm611 = vcmp.gt.f32.partialorder %v587, -inf
        %vm612 = vcmp.gt.f32.partialorder %v588, -inf
        %vm613 = vcmp.gt.f32.partialorder %v589, -inf
        %vm614 = vcmp.gt.f32.partialorder %v590, -inf
        %vm615 = vcmp.gt.f32.partialorder %v591, -inf
        %vm616 = vcmp.gt.f32.partialorder %v592, -inf
        %vm617 = vcmp.gt.f32.partialorder %v593, -inf
        %vm618 = vcmp.gt.f32.partialorder %v594, -inf
        %vm619 = vcmp.gt.f32.partialorder %v595, -inf
        %vm620 = vcmp.gt.f32.partialorder %v596, -inf
        %vm621 = vcmp.gt.f32.partialorder %v597, -inf
        %vm622 = vcmp.gt.f32.partialorder %v598, -inf
        %vm623 = vcmp.gt.f32.partialorder %v599, -inf
        %vm624 = vcmp.gt.f32.partialorder %v600, -inf
        %v625 = vsel %vm607, %v583, inf
        %v626 = vsel %vm608, %v584, inf
        %v627 = vsel %vm609, %v585, inf
        %v628 = vsel %vm610, %v586, inf
        %v629 = vsel %vm611, %v587, inf
        %v630 = vsel %vm612, %v588, inf
        %v631 = vsel %vm613, %v589, inf
        %v632 = vsel %vm614, %v590, inf
        %v633 = vsel %vm615, %v591, inf
        %v634 = vsel %vm616, %v592, inf
        %v635 = vsel %vm617, %v593, inf
        %v636 = vsel %vm618, %v594, inf
        %v637 = vsel %vm619, %v595, inf
        %v638 = vsel %vm620, %v596, inf
        %v639 = vsel %vm621, %v597, inf
        %v640 = vsel %vm622, %v598, inf
        %v641 = vsel %vm623, %v599, inf
        %v642 = vsel %vm624, %v600, inf
        %v643 = vmin.f32 %v625, %v629
        %v644 = vmin.f32 %v626, %v630
        %v645 = vmin.f32 %v627, %v631
        %v646 = vmin.f32 %v628, %v632
        %v647 = vmin.f32 %v643, %v633
        %v648 = vmin.f32 %v644, %v634
        %v649 = vmin.f32 %v645, %v635
        %v650 = vmin.f32 %v646, %v636
        %v651 = vmin.f32 %v647, %v637
        %v652 = vmin.f32 %v648, %v638
        %v653 = vmin.f32 %v649, %v639
        %v654 = vmin.f32 %v650, %v640
        %v655 = vmin.f32 %v651, %v641
        %v656 = vmin.f32 %v652, %v642
        %v657 = vmin.f32 %v655, %v656
        %v658 = vmin.f32 %v653, %v654
        %v659 = vmin.f32 %v657, %v658
        %v660 = vrot.slane %v659, 4
        %v661 = vmin.f32 %v659, %v660
        %v662 = vrot.slane %v661, 2
        %v663 = vmin.f32 %v661, %v662
        %v664 = vrot.slane %v663, 1
        %v665 = vmin.f32 %v663, %v664
        %vm666 = vcmp.gt.f32.partialorder %v583, %v665
        %vm667 = vcmp.gt.f32.partialorder %v584, %v665
        %vm668 = vcmp.gt.f32.partialorder %v585, %v665
        %vm669 = vcmp.gt.f32.partialorder %v586, %v665
        %vm670 = vcmp.gt.f32.partialorder %v587, %v665
        %vm671 = vcmp.gt.f32.partialorder %v588, %v665
        %vm672 = vcmp.gt.f32.partialorder %v589, %v665
        %vm673 = vcmp.gt.f32.partialorder %v590, %v665
        %vm674 = vcmp.gt.f32.partialorder %v591, %v665
        %vm675 = vcmp.gt.f32.partialorder %v592, %v665
        %vm676 = vcmp.gt.f32.partialorder %v593, %v665
        %vm677 = vcmp.gt.f32.partialorder %v594, %v665
        %vm678 = vcmp.gt.f32.partialorder %v595, %v665
        %vm679 = vcmp.gt.f32.partialorder %v596, %v665
        %vm680 = vcmp.gt.f32.partialorder %v597, %v665
        %vm681 = vcmp.gt.f32.partialorder %v598, %v665
        %vm682 = vcmp.gt.f32.partialorder %v599, %v665
        %vm683 = vcmp.gt.f32.partialorder %v600, %v665
        %v684 = vsel %vm666, %v583, inf
        %v685 = vsel %vm667, %v584, inf
        %v686 = vsel %vm668, %v585, inf
        %v687 = vsel %vm669, %v586, inf
        %v688 = vsel %vm670, %v587, inf
        %v689 = vsel %vm671, %v588, inf
        %v690 = vsel %vm672, %v589, inf
        %v691 = vsel %vm673, %v590, inf
        %v692 = vsel %vm674, %v591, inf
        %v693 = vsel %vm675, %v592, inf
        %v694 = vsel %vm676, %v593, inf
        %v695 = vsel %vm677, %v594, inf
        %v696 = vsel %vm678, %v595, inf
        %v697 = vsel %vm679, %v596, inf
        %v698 = vsel %vm680, %v597, inf
        %v699 = vsel %vm681, %v598, inf
        %v700 = vsel %vm682, %v599, inf
        %v701 = vsel %vm683, %v600, inf
        %v702 = vmin.f32 %v684, %v688
        %v703 = vmin.f32 %v685, %v689
        %v704 = vmin.f32 %v686, %v690
        %v705 = vmin.f32 %v687, %v691
        %v706 = vmin.f32 %v702, %v692
        %v707 = vmin.f32 %v703, %v693
        %v708 = vmin.f32 %v704, %v694
        %v709 = vmin.f32 %v705, %v695
        %v710 = vmin.f32 %v706, %v696
        %v711 = vmin.f32 %v707, %v697
        %v712 = vmin.f32 %v708, %v698
        %v713 = vmin.f32 %v709, %v699
        %v714 = vmin.f32 %v710, %v700
        %v715 = vmin.f32 %v711, %v701
        %v716 = vmin.f32 %v714, %v715
        %v717 = vmin.f32 %v712, %v713
        %v718 = vmin.f32 %v716, %v717
        %v719 = vrot.slane %v718, 4
        %v720 = vmin.f32 %v718, %v719
        %v721 = vrot.slane %v720, 2
        %v722 = vmin.f32 %v720, %v721
        %v723 = vrot.slane %v722, 1
        %v724 = vmin.f32 %v722, %v723
        %vm725 = vcmp.gt.f32.partialorder %v583, %v724
        %vm726 = vcmp.gt.f32.partialorder %v584, %v724
        %vm727 = vcmp.gt.f32.partialorder %v585, %v724
        %vm728 = vcmp.gt.f32.partialorder %v586, %v724
        %vm729 = vcmp.gt.f32.partialorder %v587, %v724
        %vm730 = vcmp.gt.f32.partialorder %v588, %v724
        %vm731 = vcmp.gt.f32.partialorder %v589, %v724
        %vm732 = vcmp.gt.f32.partialorder %v590, %v724
        %vm733 = vcmp.gt.f32.partialorder %v591, %v724
        %vm734 = vcmp.gt.f32.partialorder %v592, %v724
        %vm735 = vcmp.gt.f32.partialorder %v593, %v724
        %vm736 = vcmp.gt.f32.partialorder %v594, %v724
        %vm737 = vcmp.gt.f32.partialorder %v595, %v724
        %vm738 = vcmp.gt.f32.partialorder %v596, %v724
        %vm739 = vcmp.gt.f32.partialorder %v597, %v724
        %vm740 = vcmp.gt.f32.partialorder %v598, %v724
        %vm741 = vcmp.gt.f32.partialorder %v599, %v724
        %vm742 = vcmp.gt.f32.partialorder %v600, %v724
        %v743 = vsel %vm725, %v583, inf
        %v744 = vsel %vm726, %v584, inf
        %v745 = vsel %vm727, %v585, inf
        %v746 = vsel %vm728, %v586, inf
        %v747 = vsel %vm729, %v587, inf
        %v748 = vsel %vm730, %v588, inf
        %v749 = vsel %vm731, %v589, inf
        %v750 = vsel %vm732, %v590, inf
        %v751 = vsel %vm733, %v591, inf
        %v752 = vsel %vm734, %v592, inf
        %v753 = vsel %vm735, %v593, inf
        %v754 = vsel %vm736, %v594, inf
        %v755 = vsel %vm737, %v595, inf
        %v756 = vsel %vm738, %v596, inf
        %v757 = vsel %vm739, %v597, inf
        %v758 = vsel %vm740, %v598, inf
        %v759 = vsel %vm741, %v599, inf
        %v760 = vsel %vm742, %v600, inf
        %v761 = vmin.f32 %v743, %v747
        %v762 = vmin.f32 %v744, %v748
        %v763 = vmin.f32 %v745, %v749
        %v764 = vmin.f32 %v746, %v750
        %v765 = vmin.f32 %v761, %v751
        %v766 = vmin.f32 %v762, %v752
        %v767 = vmin.f32 %v763, %v753
        %v768 = vmin.f32 %v764, %v754
        %v769 = vmin.f32 %v765, %v755
        %v770 = vmin.f32 %v766, %v756
        %v771 = vmin.f32 %v767, %v757
        %v772 = vmin.f32 %v768, %v758
        %v773 = vmin.f32 %v769, %v759
        %v774 = vmin.f32 %v770, %v760
        %v775 = vmin.f32 %v773, %v774
        %v776 = vmin.f32 %v771, %v772
        %v777 = vmin.f32 %v775, %v776
        %v778 = vrot.slane %v777, 4
        %v779 = vmin.f32 %v777, %v778
        %v780 = vrot.slane %v779, 2
        %v781 = vmin.f32 %v779, %v780
        %v782 = vrot.slane %v781, 1
        %v783 = vmin.f32 %v781, %v782
        %vm784 = vcmp.gt.f32.partialorder %v583, %v783
        %vm785 = vcmp.gt.f32.partialorder %v584, %v783
        %vm786 = vcmp.gt.f32.partialorder %v585, %v783
        %vm787 = vcmp.gt.f32.partialorder %v586, %v783
        %vm788 = vcmp.gt.f32.partialorder %v587, %v783
        %vm789 = vcmp.gt.f32.partialorder %v588, %v783
        %vm790 = vcmp.gt.f32.partialorder %v589, %v783
        %vm791 = vcmp.gt.f32.partialorder %v590, %v783
        %vm792 = vcmp.gt.f32.partialorder %v591, %v783
        %vm793 = vcmp.gt.f32.partialorder %v592, %v783
        %vm794 = vcmp.gt.f32.partialorder %v593, %v783
        %vm795 = vcmp.gt.f32.partialorder %v594, %v783
        %vm796 = vcmp.gt.f32.partialorder %v595, %v783
        %vm797 = vcmp.gt.f32.partialorder %v596, %v783
        %vm798 = vcmp.gt.f32.partialorder %v597, %v783
        %vm799 = vcmp.gt.f32.partialorder %v598, %v783
        %vm800 = vcmp.gt.f32.partialorder %v599, %v783
        %vm801 = vcmp.gt.f32.partialorder %v600, %v783
        %v802 = vsel %vm784, %v583, inf
        %v803 = vsel %vm785, %v584, inf
        %v804 = vsel %vm786, %v585, inf
        %v805 = vsel %vm787, %v586, inf
        %v806 = vsel %vm788, %v587, inf
        %v807 = vsel %vm789, %v588, inf
        %v808 = vsel %vm790, %v589, inf
        %v809 = vsel %vm791, %v590, inf
        %v810 = vsel %vm792, %v591, inf
        %v811 = vsel %vm793, %v592, inf
        %v812 = vsel %vm794, %v593, inf
        %v813 = vsel %vm795, %v594, inf
        %v814 = vsel %vm796, %v595, inf
        %v815 = vsel %vm797, %v596, inf
        %v816 = vsel %vm798, %v597, inf
        %v817 = vsel %vm799, %v598, inf
        %v818 = vsel %vm800, %v599, inf
        %v819 = vsel %vm801, %v600, inf
        %v820 = vmin.f32 %v802, %v806
        %v821 = vmin.f32 %v803, %v807
        %v822 = vmin.f32 %v804, %v808
        %v823 = vmin.f32 %v805, %v809
        %v824 = vmin.f32 %v820, %v810
        %v825 = vmin.f32 %v821, %v811
        %v826 = vmin.f32 %v822, %v812
        %v827 = vmin.f32 %v823, %v813
        %v828 = vmin.f32 %v824, %v814
        %v829 = vmin.f32 %v825, %v815
        %v830 = vmin.f32 %v826, %v816
        %v831 = vmin.f32 %v827, %v817
        %v832 = vmin.f32 %v828, %v818
        %v833 = vmin.f32 %v829, %v819
        %v834 = vmin.f32 %v832, %v833
        %v835 = vmin.f32 %v830, %v831
        %v836 = vmin.f32 %v834, %v835
        %v837 = vrot.slane %v836, 4
        %v838 = vmin.f32 %v836, %v837
        %v839 = vrot.slane %v838, 2
        %v840 = vmin.f32 %v838, %v839
        %v841 = vrot.slane %v840, 1
        %v842 = vmin.f32 %v840, %v841
        %vm843 = vcmp.gt.f32.partialorder %v583, %v842
        %vm844 = vcmp.gt.f32.partialorder %v584, %v842
        %vm845 = vcmp.gt.f32.partialorder %v585, %v842
        %vm846 = vcmp.gt.f32.partialorder %v586, %v842
        %vm847 = vcmp.gt.f32.partialorder %v587, %v842
        %vm848 = vcmp.gt.f32.partialorder %v588, %v842
        %vm849 = vcmp.gt.f32.partialorder %v589, %v842
        %vm850 = vcmp.gt.f32.partialorder %v590, %v842
        %vm851 = vcmp.gt.f32.partialorder %v591, %v842
        %vm852 = vcmp.gt.f32.partialorder %v592, %v842
        %vm853 = vcmp.gt.f32.partialorder %v593, %v842
        %vm854 = vcmp.gt.f32.partialorder %v594, %v842
        %vm855 = vcmp.gt.f32.partialorder %v595, %v842
        %vm856 = vcmp.gt.f32.partialorder %v596, %v842
        %vm857 = vcmp.gt.f32.partialorder %v597, %v842
        %vm858 = vcmp.gt.f32.partialorder %v598, %v842
        %vm859 = vcmp.gt.f32.partialorder %v599, %v842
        %vm860 = vcmp.gt.f32.partialorder %v600, %v842
        %v861 = vsel %vm843, %v583, inf
        %v862 = vsel %vm844, %v584, inf
        %v863 = vsel %vm845, %v585, inf
        %v864 = vsel %vm846, %v586, inf
        %v865 = vsel %vm847, %v587, inf
        %v866 = vsel %vm848, %v588, inf
        %v867 = vsel %vm849, %v589, inf
        %v868 = vsel %vm850, %v590, inf
        %v869 = vsel %vm851, %v591, inf
        %v870 = vsel %vm852, %v592, inf
        %v871 = vsel %vm853, %v593, inf
        %v872 = vsel %vm854, %v594, inf
        %v873 = vsel %vm855, %v595, inf
        %v874 = vsel %vm856, %v596, inf
        %v875 = vsel %vm857, %v597, inf
        %v876 = vsel %vm858, %v598, inf
        %v877 = vsel %vm859, %v599, inf
        %v878 = vsel %vm860, %v600, inf
        %v879 = vmin.f32 %v861, %v865
        %v880 = vmin.f32 %v862, %v866
        %v881 = vmin.f32 %v863, %v867
        %v882 = vmin.f32 %v864, %v868
        %v883 = vmin.f32 %v879, %v869
        %v884 = vmin.f32 %v880, %v870
        %v885 = vmin.f32 %v881, %v871
        %v886 = vmin.f32 %v882, %v872
        %v887 = vmin.f32 %v883, %v873
        %v888 = vmin.f32 %v884, %v874
        %v889 = vmin.f32 %v885, %v875
        %v890 = vmin.f32 %v886, %v876
        %v891 = vmin.f32 %v887, %v877
        %v892 = vmin.f32 %v888, %v878
        %v893 = vmin.f32 %v891, %v892
        %v894 = vmin.f32 %v889, %v890
        %v895 = vmin.f32 %v893, %v894
        %v896 = vrot.slane %v895, 4
        %v897 = vmin.f32 %v895, %v896
        %v898 = vrot.slane %v897, 2
        %v899 = vmin.f32 %v897, %v898
        %v900 = vrot.slane %v899, 1
        %v901 = vmin.f32 %v899, %v900
        %vm902 = vcmp.gt.f32.partialorder %v583, %v901
        %vm903 = vcmp.gt.f32.partialorder %v584, %v901
        %vm904 = vcmp.gt.f32.partialorder %v585, %v901
        %vm905 = vcmp.gt.f32.partialorder %v586, %v901
        %vm906 = vcmp.gt.f32.partialorder %v587, %v901
        %vm907 = vcmp.gt.f32.partialorder %v588, %v901
        %vm908 = vcmp.gt.f32.partialorder %v589, %v901
        %vm909 = vcmp.gt.f32.partialorder %v590, %v901
        %vm910 = vcmp.gt.f32.partialorder %v591, %v901
        %vm911 = vcmp.gt.f32.partialorder %v592, %v901
        %vm912 = vcmp.gt.f32.partialorder %v593, %v901
        %vm913 = vcmp.gt.f32.partialorder %v594, %v901
        %vm914 = vcmp.gt.f32.partialorder %v595, %v901
        %vm915 = vcmp.gt.f32.partialorder %v596, %v901
        %vm916 = vcmp.gt.f32.partialorder %v597, %v901
        %vm917 = vcmp.gt.f32.partialorder %v598, %v901
        %vm918 = vcmp.gt.f32.partialorder %v599, %v901
        %vm919 = vcmp.gt.f32.partialorder %v600, %v901
        %v920 = vsel %vm902, %v583, inf
        %v921 = vsel %vm903, %v584, inf
        %v922 = vsel %vm904, %v585, inf
        %v923 = vsel %vm905, %v586, inf
        %v924 = vsel %vm906, %v587, inf
        %v925 = vsel %vm907, %v588, inf
        %v926 = vsel %vm908, %v589, inf
        %v927 = vsel %vm909, %v590, inf
        %v928 = vsel %vm910, %v591, inf
        %v929 = vsel %vm911, %v592, inf
        %v930 = vsel %vm912, %v593, inf
        %v931 = vsel %vm913, %v594, inf
        %v932 = vsel %vm914, %v595, inf
        %v933 = vsel %vm915, %v596, inf
        %v934 = vsel %vm916, %v597, inf
        %v935 = vsel %vm917, %v598, inf
        %v936 = vsel %vm918, %v599, inf
        %v937 = vsel %vm919, %v600, inf
        %v938 = vmin.f32 %v920, %v924
        %v939 = vmin.f32 %v921, %v925
        %v940 = vmin.f32 %v922, %v926
        %v941 = vmin.f32 %v923, %v927
        %v942 = vmin.f32 %v938, %v928
        %v943 = vmin.f32 %v939, %v929
        %v944 = vmin.f32 %v940, %v930
        %v945 = vmin.f32 %v941, %v931
        %v946 = vmin.f32 %v942, %v932
        %v947 = vmin.f32 %v943, %v933
        %v948 = vmin.f32 %v944, %v934
        %v949 = vmin.f32 %v945, %v935
        %v950 = vmin.f32 %v946, %v936
        %v951 = vmin.f32 %v947, %v937
        %v952 = vmin.f32 %v950, %v951
        %v953 = vmin.f32 %v948, %v949
        %v954 = vmin.f32 %v952, %v953
        %v955 = vrot.slane %v954, 4
        %v956 = vmin.f32 %v954, %v955
        %v957 = vrot.slane %v956, 2
        %v958 = vmin.f32 %v956, %v957
        %v959 = vrot.slane %v958, 1
        %v960 = vmin.f32 %v958, %v959
        %vm961 = vcmp.gt.f32.partialorder %v583, %v960
        %vm962 = vcmp.gt.f32.partialorder %v584, %v960
        %vm963 = vcmp.gt.f32.partialorder %v585, %v960
        %vm964 = vcmp.gt.f32.partialorder %v586, %v960
        %vm965 = vcmp.gt.f32.partialorder %v587, %v960
        %vm966 = vcmp.gt.f32.partialorder %v588, %v960
        %vm967 = vcmp.gt.f32.partialorder %v589, %v960
        %vm968 = vcmp.gt.f32.partialorder %v590, %v960
        %vm969 = vcmp.gt.f32.partialorder %v591, %v960
        %vm970 = vcmp.gt.f32.partialorder %v592, %v960
        %vm971 = vcmp.gt.f32.partialorder %v593, %v960
        %vm972 = vcmp.gt.f32.partialorder %v594, %v960
        %vm973 = vcmp.gt.f32.partialorder %v595, %v960
        %vm974 = vcmp.gt.f32.partialorder %v596, %v960
        %vm975 = vcmp.gt.f32.partialorder %v597, %v960
        %vm976 = vcmp.gt.f32.partialorder %v598, %v960
        %vm977 = vcmp.gt.f32.partialorder %v599, %v960
        %vm978 = vcmp.gt.f32.partialorder %v600, %v960
        %v979 = vsel %vm961, %v583, inf
        %v980 = vsel %vm962, %v584, inf
        %v981 = vsel %vm963, %v585, inf
        %v982 = vsel %vm964, %v586, inf
        %v983 = vsel %vm965, %v587, inf
        %v984 = vsel %vm966, %v588, inf
        %v985 = vsel %vm967, %v589, inf
        %v986 = vsel %vm968, %v590, inf
        %v987 = vsel %vm969, %v591, inf
        %v988 = vsel %vm970, %v592, inf
        %v989 = vsel %vm971, %v593, inf
        %v990 = vsel %vm972, %v594, inf
        %v991 = vsel %vm973, %v595, inf
        %v992 = vsel %vm974, %v596, inf
        %v993 = vsel %vm975, %v597, inf
        %v994 = vsel %vm976, %v598, inf
        %v995 = vsel %vm977, %v599, inf
        %v996 = vsel %vm978, %v600, inf
        %v997 = vmin.f32 %v979, %v983
        %v998 = vmin.f32 %v980, %v984
        %v999 = vmin.f32 %v981, %v985
        %v1000 = vmin.f32 %v982, %v986
        %v1001 = vmin.f32 %v997, %v987
        %v1002 = vmin.f32 %v998, %v988
        %v1003 = vmin.f32 %v999, %v989
        %v1004 = vmin.f32 %v1000, %v990
        %v1005 = vmin.f32 %v1001, %v991
        %v1006 = vmin.f32 %v1002, %v992
        %v1007 = vmin.f32 %v1003, %v993
        %v1008 = vmin.f32 %v1004, %v994
        %v1009 = vmin.f32 %v1005, %v995
        %v1010 = vmin.f32 %v1006, %v996
        %v1011 = vmin.f32 %v1009, %v1010
        %v1012 = vmin.f32 %v1007, %v1008
        %v1013 = vmin.f32 %v1011, %v1012
        %v1014 = vrot.slane %v1013, 4
        %v1015 = vmin.f32 %v1013, %v1014
        %v1016 = vrot.slane %v1015, 2
        %v1017 = vmin.f32 %v1015, %v1016
        %v1018 = vrot.slane %v1017, 1
        %v1019 = vmin.f32 %v1017, %v1018
        %vm1020 = vcmp.gt.f32.partialorder %v583, %v1019
        %vm1021 = vcmp.gt.f32.partialorder %v584, %v1019
        %vm1022 = vcmp.gt.f32.partialorder %v585, %v1019
        %vm1023 = vcmp.gt.f32.partialorder %v586, %v1019
        %vm1024 = vcmp.gt.f32.partialorder %v587, %v1019
        %vm1025 = vcmp.gt.f32.partialorder %v588, %v1019
        %vm1026 = vcmp.gt.f32.partialorder %v589, %v1019
        %vm1027 = vcmp.gt.f32.partialorder %v590, %v1019
        %vm1028 = vcmp.gt.f32.partialorder %v591, %v1019
        %vm1029 = vcmp.gt.f32.partialorder %v592, %v1019
        %vm1030 = vcmp.gt.f32.partialorder %v593, %v1019
        %vm1031 = vcmp.gt.f32.partialorder %v594, %v1019
        %vm1032 = vcmp.gt.f32.partialorder %v595, %v1019
        %vm1033 = vcmp.gt.f32.partialorder %v596, %v1019
        %vm1034 = vcmp.gt.f32.partialorder %v597, %v1019
        %vm1035 = vcmp.gt.f32.partialorder %v598, %v1019
        %vm1036 = vcmp.gt.f32.partialorder %v599, %v1019
        %vm1037 = vcmp.gt.f32.partialorder %v600, %v1019
        %v1038 = vsel %vm1020, %v583, inf
        %v1039 = vsel %vm1021, %v584, inf
        %v1040 = vsel %vm1022, %v585, inf
        %v1041 = vsel %vm1023, %v586, inf
        %v1042 = vsel %vm1024, %v587, inf
        %v1043 = vsel %vm1025, %v588, inf
        %v1044 = vsel %vm1026, %v589, inf
        %v1045 = vsel %vm1027, %v590, inf
        %v1046 = vsel %vm1028, %v591, inf
        %v1047 = vsel %vm1029, %v592, inf
        %v1048 = vsel %vm1030, %v593, inf
        %v1049 = vsel %vm1031, %v594, inf
        %v1050 = vsel %vm1032, %v595, inf
        %v1051 = vsel %vm1033, %v596, inf
        %v1052 = vsel %vm1034, %v597, inf
        %v1053 = vsel %vm1035, %v598, inf
        %v1054 = vsel %vm1036, %v599, inf
        %v1055 = vsel %vm1037, %v600, inf
        %v1056 = vmin.f32 %v1038, %v1042
        %v1057 = vmin.f32 %v1039, %v1043
        %v1058 = vmin.f32 %v1040, %v1044
        %v1059 = vmin.f32 %v1041, %v1045
        %v1060 = vmin.f32 %v1056, %v1046
        %v1061 = vmin.f32 %v1057, %v1047
        %v1062 = vmin.f32 %v1058, %v1048
        %v1063 = vmin.f32 %v1059, %v1049
        %v1064 = vmin.f32 %v1060, %v1050
        %v1065 = vmin.f32 %v1061, %v1051
        %v1066 = vmin.f32 %v1062, %v1052
        %v1067 = vmin.f32 %v1063, %v1053
        %v1068 = vmin.f32 %v1064, %v1054
        %v1069 = vmin.f32 %v1065, %v1055
        %v1070 = vmin.f32 %v1068, %v1069
        %v1071 = vmin.f32 %v1066, %v1067
        %v1072 = vmin.f32 %v1070, %v1071
        %v1073 = vrot.slane %v1072, 4
        %v1074 = vmin.f32 %v1072, %v1073
        %v1075 = vrot.slane %v1074, 2
        %v1076 = vmin.f32 %v1074, %v1075
        %v1077 = vrot.slane %v1076, 1
        %v1078 = vmin.f32 %v1076, %v1077
        %vm1079 = vcmp.gt.f32.partialorder %v583, %v1078
        %vm1080 = vcmp.gt.f32.partialorder %v584, %v1078
        %vm1081 = vcmp.gt.f32.partialorder %v585, %v1078
        %vm1082 = vcmp.gt.f32.partialorder %v586, %v1078
        %vm1083 = vcmp.gt.f32.partialorder %v587, %v1078
        %vm1084 = vcmp.gt.f32.partialorder %v588, %v1078
        %vm1085 = vcmp.gt.f32.partialorder %v589, %v1078
        %vm1086 = vcmp.gt.f32.partialorder %v590, %v1078
        %vm1087 = vcmp.gt.f32.partialorder %v591, %v1078
        %vm1088 = vcmp.gt.f32.partialorder %v592, %v1078
        %vm1089 = vcmp.gt.f32.partialorder %v593, %v1078
        %vm1090 = vcmp.gt.f32.partialorder %v594, %v1078
        %vm1091 = vcmp.gt.f32.partialorder %v595, %v1078
        %vm1092 = vcmp.gt.f32.partialorder %v596, %v1078
        %vm1093 = vcmp.gt.f32.partialorder %v597, %v1078
        %vm1094 = vcmp.gt.f32.partialorder %v598, %v1078
        %vm1095 = vcmp.gt.f32.partialorder %v599, %v1078
        %vm1096 = vcmp.gt.f32.partialorder %v600, %v1078
        %v1097 = vsel %vm1079, %v583, inf
        %v1098 = vsel %vm1080, %v584, inf
        %v1099 = vsel %vm1081, %v585, inf
        %v1100 = vsel %vm1082, %v586, inf
        %v1101 = vsel %vm1083, %v587, inf
        %v1102 = vsel %vm1084, %v588, inf
        %v1103 = vsel %vm1085, %v589, inf
        %v1104 = vsel %vm1086, %v590, inf
        %v1105 = vsel %vm1087, %v591, inf
        %v1106 = vsel %vm1088, %v592, inf
        %v1107 = vsel %vm1089, %v593, inf
        %v1108 = vsel %vm1090, %v594, inf
        %v1109 = vsel %vm1091, %v595, inf
        %v1110 = vsel %vm1092, %v596, inf
        %v1111 = vsel %vm1093, %v597, inf
        %v1112 = vsel %vm1094, %v598, inf
        %v1113 = vsel %vm1095, %v599, inf
        %v1114 = vsel %vm1096, %v600, inf
        %v1115 = vmin.f32 %v1097, %v1101
        %v1116 = vmin.f32 %v1098, %v1102
        %v1117 = vmin.f32 %v1099, %v1103
        %v1118 = vmin.f32 %v1100, %v1104
        %v1119 = vmin.f32 %v1115, %v1105
        %v1120 = vmin.f32 %v1116, %v1106
        %v1121 = vmin.f32 %v1117, %v1107
        %v1122 = vmin.f32 %v1118, %v1108
        %v1123 = vmin.f32 %v1119, %v1109
        %v1124 = vmin.f32 %v1120, %v1110
        %v1125 = vmin.f32 %v1121, %v1111
        %v1126 = vmin.f32 %v1122, %v1112
        %v1127 = vmin.f32 %v1123, %v1113
        %v1128 = vmin.f32 %v1124, %v1114
        %v1129 = vmin.f32 %v1127, %v1128
        %v1130 = vmin.f32 %v1125, %v1126
        %v1131 = vmin.f32 %v1129, %v1130
        %v1132 = vrot.slane %v1131, 4
        %v1133 = vmin.f32 %v1131, %v1132
        %v1134 = vrot.slane %v1133, 2
        %v1135 = vmin.f32 %v1133, %v1134
        %v1136 = vrot.slane %v1135, 1
        %v1137 = vmin.f32 %v1135, %v1136
        %vm1138 = vcmp.gt.f32.partialorder %v583, %v1137
        %vm1139 = vcmp.gt.f32.partialorder %v584, %v1137
        %vm1140 = vcmp.gt.f32.partialorder %v585, %v1137
        %vm1141 = vcmp.gt.f32.partialorder %v586, %v1137
        %vm1142 = vcmp.gt.f32.partialorder %v587, %v1137
        %vm1143 = vcmp.gt.f32.partialorder %v588, %v1137
        %vm1144 = vcmp.gt.f32.partialorder %v589, %v1137
        %vm1145 = vcmp.gt.f32.partialorder %v590, %v1137
        %vm1146 = vcmp.gt.f32.partialorder %v591, %v1137
        %vm1147 = vcmp.gt.f32.partialorder %v592, %v1137
        %vm1148 = vcmp.gt.f32.partialorder %v593, %v1137
        %vm1149 = vcmp.gt.f32.partialorder %v594, %v1137
        %vm1150 = vcmp.gt.f32.partialorder %v595, %v1137
        %vm1151 = vcmp.gt.f32.partialorder %v596, %v1137
        %vm1152 = vcmp.gt.f32.partialorder %v597, %v1137
        %vm1153 = vcmp.gt.f32.partialorder %v598, %v1137
        %vm1154 = vcmp.gt.f32.partialorder %v599, %v1137
        %vm1155 = vcmp.gt.f32.partialorder %v600, %v1137
        %v1156 = vsel %vm1138, %v583, inf
        %v1157 = vsel %vm1139, %v584, inf
        %v1158 = vsel %vm1140, %v585, inf
        %v1159 = vsel %vm1141, %v586, inf
        %v1160 = vsel %vm1142, %v587, inf
        %v1161 = vsel %vm1143, %v588, inf
        %v1162 = vsel %vm1144, %v589, inf
        %v1163 = vsel %vm1145, %v590, inf
        %v1164 = vsel %vm1146, %v591, inf
        %v1165 = vsel %vm1147, %v592, inf
        %v1166 = vsel %vm1148, %v593, inf
        %v1167 = vsel %vm1149, %v594, inf
        %v1168 = vsel %vm1150, %v595, inf
        %v1169 = vsel %vm1151, %v596, inf
        %v1170 = vsel %vm1152, %v597, inf
        %v1171 = vsel %vm1153, %v598, inf
        %v1172 = vsel %vm1154, %v599, inf
        %v1173 = vsel %vm1155, %v600, inf
        %v1174 = vmin.f32 %v1156, %v1160
        %v1175 = vmin.f32 %v1157, %v1161
        %v1176 = vmin.f32 %v1158, %v1162
        %v1177 = vmin.f32 %v1159, %v1163
        %v1178 = vmin.f32 %v1174, %v1164
        %v1179 = vmin.f32 %v1175, %v1165
        %v1180 = vmin.f32 %v1176, %v1166
        %v1181 = vmin.f32 %v1177, %v1167
        %v1182 = vmin.f32 %v1178, %v1168
        %v1183 = vmin.f32 %v1179, %v1169
        %v1184 = vmin.f32 %v1180, %v1170
        %v1185 = vmin.f32 %v1181, %v1171
        %v1186 = vmin.f32 %v1182, %v1172
        %v1187 = vmin.f32 %v1183, %v1173
        %v1188 = vmin.f32 %v1186, %v1187
        %v1189 = vmin.f32 %v1184, %v1185
        %v1190 = vmin.f32 %v1188, %v1189
        %v1191 = vrot.slane %v1190, 4
        %v1192 = vmin.f32 %v1190, %v1191
        %v1193 = vrot.slane %v1192, 2
        %v1194 = vmin.f32 %v1192, %v1193
        %v1195 = vrot.slane %v1194, 1
        %v1196 = vmin.f32 %v1194, %v1195
        %vm1197 = vcmp.gt.f32.partialorder %v583, %v1196
        %vm1198 = vcmp.gt.f32.partialorder %v584, %v1196
        %vm1199 = vcmp.gt.f32.partialorder %v585, %v1196
        %vm1200 = vcmp.gt.f32.partialorder %v586, %v1196
        %vm1201 = vcmp.gt.f32.partialorder %v587, %v1196
        %vm1202 = vcmp.gt.f32.partialorder %v588, %v1196
        %vm1203 = vcmp.gt.f32.partialorder %v589, %v1196
        %vm1204 = vcmp.gt.f32.partialorder %v590, %v1196
        %vm1205 = vcmp.gt.f32.partialorder %v591, %v1196
        %vm1206 = vcmp.gt.f32.partialorder %v592, %v1196
        %vm1207 = vcmp.gt.f32.partialorder %v593, %v1196
        %vm1208 = vcmp.gt.f32.partialorder %v594, %v1196
        %vm1209 = vcmp.gt.f32.partialorder %v595, %v1196
        %vm1210 = vcmp.gt.f32.partialorder %v596, %v1196
        %vm1211 = vcmp.gt.f32.partialorder %v597, %v1196
        %vm1212 = vcmp.gt.f32.partialorder %v598, %v1196
        %vm1213 = vcmp.gt.f32.partialorder %v599, %v1196
        %vm1214 = vcmp.gt.f32.partialorder %v600, %v1196
        %v1215 = vsel %vm1197, %v583, inf
        %v1216 = vsel %vm1198, %v584, inf
        %v1217 = vsel %vm1199, %v585, inf
        %v1218 = vsel %vm1200, %v586, inf
        %v1219 = vsel %vm1201, %v587, inf
        %v1220 = vsel %vm1202, %v588, inf
        %v1221 = vsel %vm1203, %v589, inf
        %v1222 = vsel %vm1204, %v590, inf
        %v1223 = vsel %vm1205, %v591, inf
        %v1224 = vsel %vm1206, %v592, inf
        %v1225 = vsel %vm1207, %v593, inf
        %v1226 = vsel %vm1208, %v594, inf
        %v1227 = vsel %vm1209, %v595, inf
        %v1228 = vsel %vm1210, %v596, inf
        %v1229 = vsel %vm1211, %v597, inf
        %v1230 = vsel %vm1212, %v598, inf
        %v1231 = vsel %vm1213, %v599, inf
        %v1232 = vsel %vm1214, %v600, inf
        %v1233 = vmin.f32 %v1215, %v1219
        %v1234 = vmin.f32 %v1216, %v1220
        %v1235 = vmin.f32 %v1217, %v1221
        %v1236 = vmin.f32 %v1218, %v1222
        %v1237 = vmin.f32 %v1233, %v1223
        %v1238 = vmin.f32 %v1234, %v1224
        %v1239 = vmin.f32 %v1235, %v1225
        %v1240 = vmin.f32 %v1236, %v1226
        %v1241 = vmin.f32 %v1237, %v1227
        %v1242 = vmin.f32 %v1238, %v1228
        %v1243 = vmin.f32 %v1239, %v1229
        %v1244 = vmin.f32 %v1240, %v1230
        %v1245 = vmin.f32 %v1241, %v1231
        %v1246 = vmin.f32 %v1242, %v1232
        %v1247 = vmin.f32 %v1245, %v1246
        %v1248 = vmin.f32 %v1243, %v1244
        %v1249 = vmin.f32 %v1247, %v1248
        %v1250 = vrot.slane %v1249, 4
        %v1251 = vmin.f32 %v1249, %v1250
        %v1252 = vrot.slane %v1251, 2
        %v1253 = vmin.f32 %v1251, %v1252
        %v1254 = vrot.slane %v1253, 1
        %v1255 = vmin.f32 %v1253, %v1254
        %vm1256 = vcmp.gt.f32.partialorder %v583, %v1255
        %vm1257 = vcmp.gt.f32.partialorder %v584, %v1255
        %vm1258 = vcmp.gt.f32.partialorder %v585, %v1255
        %vm1259 = vcmp.gt.f32.partialorder %v586, %v1255
        %vm1260 = vcmp.gt.f32.partialorder %v587, %v1255
        %vm1261 = vcmp.gt.f32.partialorder %v588, %v1255
        %vm1262 = vcmp.gt.f32.partialorder %v589, %v1255
        %vm1263 = vcmp.gt.f32.partialorder %v590, %v1255
        %vm1264 = vcmp.gt.f32.partialorder %v591, %v1255
        %vm1265 = vcmp.gt.f32.partialorder %v592, %v1255
        %vm1266 = vcmp.gt.f32.partialorder %v593, %v1255
        %vm1267 = vcmp.gt.f32.partialorder %v594, %v1255
        %vm1268 = vcmp.gt.f32.partialorder %v595, %v1255
        %vm1269 = vcmp.gt.f32.partialorder %v596, %v1255
        %vm1270 = vcmp.gt.f32.partialorder %v597, %v1255
        %vm1271 = vcmp.gt.f32.partialorder %v598, %v1255
        %vm1272 = vcmp.gt.f32.partialorder %v599, %v1255
        %vm1273 = vcmp.gt.f32.partialorder %v600, %v1255
        %v1274 = vsel %vm1256, %v583, inf
        %v1275 = vsel %vm1257, %v584, inf
        %v1276 = vsel %vm1258, %v585, inf
        %v1277 = vsel %vm1259, %v586, inf
        %v1278 = vsel %vm1260, %v587, inf
        %v1279 = vsel %vm1261, %v588, inf
        %v1280 = vsel %vm1262, %v589, inf
        %v1281 = vsel %vm1263, %v590, inf
        %v1282 = vsel %vm1264, %v591, inf
        %v1283 = vsel %vm1265, %v592, inf
        %v1284 = vsel %vm1266, %v593, inf
        %v1285 = vsel %vm1267, %v594, inf
        %v1286 = vsel %vm1268, %v595, inf
        %v1287 = vsel %vm1269, %v596, inf
        %v1288 = vsel %vm1270, %v597, inf
        %v1289 = vsel %vm1271, %v598, inf
        %v1290 = vsel %vm1272, %v599, inf
        %v1291 = vsel %vm1273, %v600, inf
        %v1292 = vmin.f32 %v1274, %v1278
        %v1293 = vmin.f32 %v1275, %v1279
        %v1294 = vmin.f32 %v1276, %v1280
        %v1295 = vmin.f32 %v1277, %v1281
        %v1296 = vmin.f32 %v1292, %v1282
        %v1297 = vmin.f32 %v1293, %v1283
        %v1298 = vmin.f32 %v1294, %v1284
        %v1299 = vmin.f32 %v1295, %v1285
        %v1300 = vmin.f32 %v1296, %v1286
        %v1301 = vmin.f32 %v1297, %v1287
        %v1302 = vmin.f32 %v1298, %v1288
        %v1303 = vmin.f32 %v1299, %v1289
        %v1304 = vmin.f32 %v1300, %v1290
        %v1305 = vmin.f32 %v1301, %v1291
        %v1306 = vmin.f32 %v1304, %v1305
        %v1307 = vmin.f32 %v1302, %v1303
        %v1308 = vmin.f32 %v1306, %v1307
        %v1309 = vrot.slane %v1308, 4
        %v1310 = vmin.f32 %v1308, %v1309
        %v1311 = vrot.slane %v1310, 2
        %v1312 = vmin.f32 %v1310, %v1311
        %v1313 = vrot.slane %v1312, 1
        %v1314 = vmin.f32 %v1312, %v1313
        %vm1315 = vcmp.le.f32.partialorder %v583, %v1314
        %vm1316 = vcmp.le.f32.partialorder %v584, %v1314
        %vm1317 = vcmp.le.f32.partialorder %v585, %v1314
        %vm1318 = vcmp.le.f32.partialorder %v586, %v1314
        %vm1319 = vcmp.le.f32.partialorder %v587, %v1314
        %vm1320 = vcmp.le.f32.partialorder %v588, %v1314
        %vm1321 = vcmp.le.f32.partialorder %v589, %v1314
        %vm1322 = vcmp.le.f32.partialorder %v590, %v1314
        %vm1323 = vcmp.le.f32.partialorder %v591, %v1314
        %vm1324 = vcmp.le.f32.partialorder %v592, %v1314
        %vm1325 = vcmp.le.f32.partialorder %v593, %v1314
        %vm1326 = vcmp.le.f32.partialorder %v594, %v1314
        %vm1327 = vcmp.le.f32.partialorder %v595, %v1314
        %vm1328 = vcmp.le.f32.partialorder %v596, %v1314
        %vm1329 = vcmp.le.f32.partialorder %v597, %v1314
        %vm1330 = vcmp.le.f32.partialorder %v598, %v1314
        %vm1331 = vcmp.le.f32.partialorder %v599, %v1314
        %vm1332 = vcmp.le.f32.partialorder %v600, %v1314
        %v1333 = vand.u32 2147483647, %v297
        %v1334 = vand.u32 2147483647, %v298
        %v1335 = vand.u32 2147483647, %v299
        %v1336 = vand.u32 2147483647, %v300
        %v1337 = vand.u32 2147483647, %v301
        %v1338 = vand.u32 2147483647, %v302
        %v1339 = vand.u32 2147483647, %v303
        %v1340 = vand.u32 2147483647, %v304
        %v1341 = vand.u32 2147483647, %v305
        %v1342 = vand.u32 2147483647, %v306
        %v1343 = vand.u32 2147483647, %v307
        %v1344 = vand.u32 2147483647, %v308
        %v1345 = vand.u32 2147483647, %v309
        %v1346 = vand.u32 2147483647, %v310
        %v1347 = vand.u32 2147483647, %v311
        %v1348 = vand.u32 2147483647, %v312
        %v1349 = vand.u32 2147483647, %v313
        %v1350 = vand.u32 2147483647, %v314
        %v1351 = vsel %vm1315, %v1333, 0.0
        %v1352 = vsel %vm1316, %v1334, 0.0
        %v1353 = vsel %vm1317, %v1335, 0.0
        %v1354 = vsel %vm1318, %v1336, 0.0
        %v1355 = vsel %vm1319, %v1337, 0.0
        %v1356 = vsel %vm1320, %v1338, 0.0
        %v1357 = vsel %vm1321, %v1339, 0.0
        %v1358 = vsel %vm1322, %v1340, 0.0
        %v1359 = vsel %vm1323, %v1341, 0.0
        %v1360 = vsel %vm1324, %v1342, 0.0
        %v1361 = vsel %vm1325, %v1343, 0.0
        %v1362 = vsel %vm1326, %v1344, 0.0
        %v1363 = vsel %vm1327, %v1345, 0.0
        %v1364 = vsel %vm1328, %v1346, 0.0
        %v1365 = vsel %vm1329, %v1347, 0.0
        %v1366 = vsel %vm1330, %v1348, 0.0
        %v1367 = vsel %vm1331, %v1349, 0.0
        %v1368 = vsel %vm1332, %v1350, 0.0
        %v1369 = vadd.f32 %v1351, %v1352
        %v1370 = vadd.f32 %v1369, %v1353
        %v1371 = vadd.f32 %v1370, %v1354
        %v1372 = vadd.f32 %v1371, %v1355
        %v1373 = vadd.f32 %v1372, %v1356
        %v1374 = vadd.f32 %v1373, %v1357
        %v1375 = vadd.f32 %v1374, %v1358
        %v1376 = vadd.f32 %v1375, %v1359
        %v1377 = vadd.f32 %v1376, %v1360
        %v1378 = vadd.f32 %v1377, %v1361
        %v1379 = vadd.f32 %v1378, %v1362
        %v1380 = vadd.f32 %v1379, %v1363
        %v1381 = vadd.f32 %v1380, %v1364
        %v1382 = vadd.f32 %v1381, %v1365
        %v1383 = vadd.f32 %v1382, %v1366
        %v1384 = vadd.f32 %v1383, %v1367
        %v1385 = vadd.f32 %v1384, %v1368
        %v1386 = vrot.slane %v1385, 4
        %v1387 = vadd.f32 %v1385, %v1386
        %v1388 = vrot.slane %v1387, 2
        %v1389 = vadd.f32 %v1387, %v1388
        %v1390 = vrot.slane %v1389, 1
        %v1391 = vadd.f32 %v1389, %v1390
        %v1392 = vmul.f32 %v333, %v1391
        %v1393 = vand.u32 2147483647, %v411
        %v1394 = vand.u32 2147483647, %v412
        %v1395 = vand.u32 2147483647, %v413
        %v1396 = vand.u32 2147483647, %v414
        %v1397 = vand.u32 2147483647, %v415
        %v1398 = vand.u32 2147483647, %v416
        %v1399 = vand.u32 2147483647, %v417
        %v1400 = vand.u32 2147483647, %v418
        %v1401 = vand.u32 2147483647, %v419
        %v1402 = vand.u32 2147483647, %v420
        %v1403 = vand.u32 2147483647, %v421
        %v1404 = vand.u32 2147483647, %v422
        %v1405 = vand.u32 2147483647, %v423
        %v1406 = vand.u32 2147483647, %v424
        %v1407 = vand.u32 2147483647, %v425
        %v1408 = vand.u32 2147483647, %v426
        %v1409 = vand.u32 2147483647, %v427
        %v1410 = vand.u32 2147483647, %v428
        %v1411 = vsel %vm1315, %v1393, 0.0
        %v1412 = vsel %vm1316, %v1394, 0.0
        %v1413 = vsel %vm1317, %v1395, 0.0
        %v1414 = vsel %vm1318, %v1396, 0.0
        %v1415 = vsel %vm1319, %v1397, 0.0
        %v1416 = vsel %vm1320, %v1398, 0.0
        %v1417 = vsel %vm1321, %v1399, 0.0
        %v1418 = vsel %vm1322, %v1400, 0.0
        %v1419 = vsel %vm1323, %v1401, 0.0
        %v1420 = vsel %vm1324, %v1402, 0.0
        %v1421 = vsel %vm1325, %v1403, 0.0
        %v1422 = vsel %vm1326, %v1404, 0.0
        %v1423 = vsel %vm1327, %v1405, 0.0
        %v1424 = vsel %vm1328, %v1406, 0.0
        %v1425 = vsel %vm1329, %v1407, 0.0
        %v1426 = vsel %vm1330, %v1408, 0.0
        %v1427 = vsel %vm1331, %v1409, 0.0
        %v1428 = vsel %vm1332, %v1410, 0.0
        %v1429 = vadd.f32 %v1411, %v1412
        %v1430 = vadd.f32 %v1429, %v1413
        %v1431 = vadd.f32 %v1430, %v1414
        %v1432 = vadd.f32 %v1431, %v1415
        %v1433 = vadd.f32 %v1432, %v1416
        %v1434 = vadd.f32 %v1433, %v1417
        %v1435 = vadd.f32 %v1434, %v1418
        %v1436 = vadd.f32 %v1435, %v1419
        %v1437 = vadd.f32 %v1436, %v1420
        %v1438 = vadd.f32 %v1437, %v1421
        %v1439 = vadd.f32 %v1438, %v1422
        %v1440 = vadd.f32 %v1439, %v1423
        %v1441 = vadd.f32 %v1440, %v1424
        %v1442 = vadd.f32 %v1441, %v1425
        %v1443 = vadd.f32 %v1442, %v1426
        %v1444 = vadd.f32 %v1443, %v1427
        %v1445 = vadd.f32 %v1444, %v1428
        %v1446 = vrot.slane %v1445, 4
        %v1447 = vadd.f32 %v1445, %v1446
        %v1448 = vrot.slane %v1447, 2
        %v1449 = vadd.f32 %v1447, %v1448
        %v1450 = vrot.slane %v1449, 1
        %v1451 = vadd.f32 %v1449, %v1450
        %v1452 = vmul.f32 %v465, %v1451
        %v1453 = vadd.f32 %v1392, %v1452
        %v1454 = vand.u32 2147483647, %v547
        %v1455 = vand.u32 2147483647, %v548
        %v1456 = vand.u32 2147483647, %v549
        %v1457 = vand.u32 2147483647, %v550
        %v1458 = vand.u32 2147483647, %v551
        %v1459 = vand.u32 2147483647, %v552
        %v1460 = vand.u32 2147483647, %v553
        %v1461 = vand.u32 2147483647, %v554
        %v1462 = vand.u32 2147483647, %v555
        %v1463 = vand.u32 2147483647, %v556
        %v1464 = vand.u32 2147483647, %v557
        %v1465 = vand.u32 2147483647, %v558
        %v1466 = vand.u32 2147483647, %v559
        %v1467 = vand.u32 2147483647, %v560
        %v1468 = vand.u32 2147483647, %v561
        %v1469 = vand.u32 2147483647, %v562
        %v1470 = vand.u32 2147483647, %v563
        %v1471 = vand.u32 2147483647, %v564
        %v1472 = vsel %vm1315, %v1454, 0.0
        %v1473 = vsel %vm1316, %v1455, 0.0
        %v1474 = vsel %vm1317, %v1456, 0.0
        %v1475 = vsel %vm1318, %v1457, 0.0
        %v1476 = vsel %vm1319, %v1458, 0.0
        %v1477 = vsel %vm1320, %v1459, 0.0
        %v1478 = vsel %vm1321, %v1460, 0.0
        %v1479 = vsel %vm1322, %v1461, 0.0
        %v1480 = vsel %vm1323, %v1462, 0.0
        %v1481 = vsel %vm1324, %v1463, 0.0
        %v1482 = vsel %vm1325, %v1464, 0.0
        %v1483 = vsel %vm1326, %v1465, 0.0
        %v1484 = vsel %vm1327, %v1466, 0.0
        %v1485 = vsel %vm1328, %v1467, 0.0
        %v1486 = vsel %vm1329, %v1468, 0.0
        %v1487 = vsel %vm1330, %v1469, 0.0
        %v1488 = vsel %vm1331, %v1470, 0.0
        %v1489 = vsel %vm1332, %v1471, 0.0
        %v1490 = vadd.f32 %v1472, %v1473
        %v1491 = vadd.f32 %v1490, %v1474
        %v1492 = vadd.f32 %v1491, %v1475
        %v1493 = vadd.f32 %v1492, %v1476
        %v1494 = vadd.f32 %v1493, %v1477
        %v1495 = vadd.f32 %v1494, %v1478
        %v1496 = vadd.f32 %v1495, %v1479
        %v1497 = vadd.f32 %v1496, %v1480
        %v1498 = vadd.f32 %v1497, %v1481
        %v1499 = vadd.f32 %v1498, %v1482
        %v1500 = vadd.f32 %v1499, %v1483
        %v1501 = vadd.f32 %v1500, %v1484
        %v1502 = vadd.f32 %v1501, %v1485
        %v1503 = vadd.f32 %v1502, %v1486
        %v1504 = vadd.f32 %v1503, %v1487
        %v1505 = vadd.f32 %v1504, %v1488
        %v1506 = vadd.f32 %v1505, %v1489
        %v1507 = vrot.slane %v1506, 4
        %v1508 = vadd.f32 %v1506, %v1507
        %v1509 = vrot.slane %v1508, 2
        %v1510 = vadd.f32 %v1508, %v1509
        %v1511 = vrot.slane %v1510, 1
        %v1512 = vadd.f32 %v1510, %v1511
        %v1513 = vmul.f32 %v601, %v1512
        %v1514 = vadd.f32 %v1453, %v1513
        %v1515 = vmul.f32 %v606, 8.778174
        %v1516 = vmul.f32 %v1514, 0.5
        %v1517 = vadd.f32 %v1515, %v1516
        %s1518 = smul.f32 %s202, 12.0
        %v1519 = vstv %s1518
        %v1520 = vadd.f32 %v1517, %v1519
        %v1521 = vrcp.pop 12.0
        %v1522 = vmul.f32 %v1520, %v1521
        %v1523 = vlaneseq
        %v1524 = vshrl.u32 %v1523, 7
        %v1525 = vsub.s32 0, %v1524
        %v1526 = vrot.slane %v1522, %v1525
        %1527 = vst [vmem:[%s175] sm:$0xff] %v1526
        %s1528 = sand.u32 %s94, 1
        %s1529 = scalar_lea.sflag [#allocation3], %s1528
        %s1530 = sand.u32 %s94, 1
        %s1531 = smul.addr %s1530, 8
        %s1532 = scalar_lea.vmem [#allocation5], %s1531
        // Predicated region
        $region37: #{tpu_custom_call.1} parent=31 // pred_check
          %p1533 = pneg %p104
        $region38: #{tpu_custom_call.1} parent=31 // pred_check_branch
          %1535 = sbr.rel (%p1533) target = $region40
        $region39: #{tpu_custom_call.1} parent=31 // pred_region
          %s1537 = ssub.s32 128, 128
          %1538 = vsyncadd %s1529, %s1537
          %s1539 = smul.addr %s18, 128
          %s1540 = scalar_lea.hbm %s3, %s1539
          %s1542 = sshll.u32 %s1532, 4
          %s1543 = int_to_ptr.vmem [resolvable:$true] %s1542
          %1545 = dma.vmem_to_hbm [thread:$0]  %s1543, 128, %s1540, %s1529
        $region40: #{tpu_custom_call.1} parent=31 // pred_fallthru
          _
      $region32: #{tpu_custom_call.1} parent=5 // pred_fallthru
        _
      %p1546 = scmp.le.s32.totalorder 2, %s13
      // Predicated region
      $region41: #{tpu_custom_call.1} parent=5 // pred_check
        %p1547 = pneg %p1546
      $region42: #{tpu_custom_call.1} parent=5 // pred_check_branch
        %1549 = sbr.rel (%p1547) target = $region44
      $region43: #{tpu_custom_call.1} parent=5 // pred_region
        %s1550 = ssub.s32 %s13, 2
        // Predicated region
        $region45: #{tpu_custom_call.1} parent=43 // pred_check
          %p1551 = pneg %p110
        $region46: #{tpu_custom_call.1} parent=43 // pred_check_branch
          %1553 = sbr.rel (%p1551) target = $region48
        $region47: #{tpu_custom_call.1} parent=43 // pred_region
          %s1554 = sand.u32 %s95, 1
          %s1555 = scalar_lea.sflag [#allocation3], %s1554
          %s1556 = sand.u32 %s95, 1
          %s1557 = smul.addr %s1556, 8
          %s1558 = scalar_lea.vmem [#allocation5], %s1557
          %1559 = dma.done %s1555, 128
        $region48: #{tpu_custom_call.1} parent=43 // pred_fallthru
          _
      $region44: #{tpu_custom_call.1} parent=5 // pred_fallthru
        _
    $region6: #{tpu_custom_call.1} parent=1 // loop_footer
      %s17 = sadd.s32 1, %s13
    $region7: #{tpu_custom_call.1} parent=1 // loop_footer_branch
      %12 = sbr.rel target = $region3
    $region8: #{tpu_custom_call.1} parent=1 // loop_exit
      _
    %1560 = vsyncpa [#allocation3], 1
    %s1561 = scalar_lea.sflag [#allocation3], 1
    %1562 = vsyncpa %s1561, 1
    %1563 = vsyncpa [#allocation4], 1
    %s1564 = scalar_lea.sflag [#allocation4], 1
    %1565 = vsyncpa %s1564, 1

</llo_original>
